<compile_context>
chip_gen: v7x
topology: tpu7x:2x2x1
jax: 0.10.0
libtpu: 0.0.40
codegen_flags: <defaults>
</compile_context>

<pallas_src>
import functools

import jax
import jax.numpy as jnp
import numpy as np
from jax.experimental import pallas as pl
from jax.experimental.pallas import tpu as pltpu


def _round_up(n, m):
    return ((n + m - 1) // m) * m


def _interaction_kernel(x_ref, y_ref, wxs_ref, wy_ref, b_ref, sel_ref, o_ref,
                        *, output_dim, bilinear_width):
    x = x_ref[...]                                    # (TB, x_dim)
    y = y_ref[...]                                    # (TB, y_dim)
    tb = x.shape[0]

    # One MXU pass over the x tile against [blockdiag(w_xy) | w_x]:
    #   columns [:bilinear_width]  -> V[b, o*(H*hy) + h*hy + j]
    #   columns [bilinear_width:]  -> w_x(x) linear term.
    r = jnp.dot(x, wxs_ref[...], preferred_element_type=jnp.float32)
    v = r[:, :bilinear_width]                         # (TB, out*H*hy)
    x_lin = r[:, bilinear_width:]                     # (TB, out)

    lin = (x_lin
           + jnp.dot(y, wy_ref[...], preferred_element_type=jnp.float32)
           + b_ref[...])                              # biases pre-summed on host

    # Lane-dense bilinear epilogue: tile y across the output axis (this matches
    # the slab's column order o*(H*hy) + h*hy + j) and reduce every
    # (H*hy)-wide group with a single 0/1-selector matmul on the MXU instead
    # of per-head reshapes + XLU reductions on ~3%-occupied vregs.
    y_tiled = jnp.concatenate([y] * output_dim, axis=1)      # (TB, out*H*hy)
    acc = lin + jnp.dot(v * y_tiled, sel_ref[...],
                        preferred_element_type=jnp.float32)  # (TB, out)

    # Lane-dense store: output is laid out (output_dim, B).  Pad the narrow
    # output axis up to a lane multiple so the transpose stays on native
    # (8, 128) tiles, transpose, then drop the padding rows before the store.
    pad = (-output_dim) % 128
    if pad:
        acc = jnp.concatenate([acc, jnp.zeros((tb, pad), acc.dtype)], axis=1)
    acc_t = acc.T                                     # (round_up(out,128), TB)
    o_ref[...] = acc_t[:output_dim, :].astype(o_ref.dtype)


def interaction_aggregation(x, y, params, *, num_heads, output_dim,
                            block_b=1024):
    """Forward pass of InteractionAggregation.  Returns (B, output_dim) f32."""
    wx_w, wx_b, wy_w, wy_b, w_xy = params
    B, x_dim = x.shape
    _, y_dim = y.shape
    hx = x_dim // num_heads
    hy = y_dim // num_heads
    C = output_dim * num_heads * hy                   # bilinear result width

    # ---- host-side weight prep (one-time; hoist / jit in real use) --------
    # Effective bilinear tensor with PyTorch's .view reinterpretation baked
    # in:  W4[h, i, o, j] == w_xy.view(H, hx, hy*out)[h, i, o*hy + j].
    # (Do NOT "fix" this to a (hy, out)-ordered reshape -- parity with torch
    #  depends on reproducing the exact view semantics.)
    w4 = w_xy.reshape(num_heads, hx, output_dim, hy)
    # Block-diagonal slab with output-major columns col = o*(H*hy) + h*hy + j
    # (zero cross-head blocks); w_x's weight is appended as the trailing
    # output_dim columns so the x tile needs exactly one MXU pass.
    eye_h = jnp.eye(num_heads, dtype=w_xy.dtype)
    slab = jnp.einsum('hioj,hk->hiokj', w4, eye_h).reshape(x_dim, C)
    wx_slab = jnp.concatenate([slab, wx_w], axis=1)   # (x_dim, C + out)
    bias = (wx_b + wy_b).reshape(1, output_dim).astype(jnp.float32)
    # 0/1 selector summing each (H*hy)-wide column group into one output.
    sel = jnp.repeat(jnp.eye(output_dim, dtype=jnp.float32),
                     num_heads * hy, axis=0)          # (C, out)

    # ---- batch tiling ------------------------------------------------------
    # 128-aligned batch tile (lane-dense transposed stores).  No jnp.pad of
    # the inputs: the tail grid block is partial, its garbage rows stay
    # row-local and are never written back.  Cap the tile so double-buffered
    # activations + in-kernel temporaries fit a v7x-safe (~64 MiB/TC) budget.
    block_b = max(128, _round_up(min(block_b, B), 128))
    per_row_bytes = 4 * (2 * (x_dim + y_dim + output_dim)
                         + 3 * (C + output_dim) + 128)
    max_rows = max(128, ((40 << 20) // per_row_bytes) // 128 * 128)
    block_b = min(block_b, max_rows)
    grid = (pl.cdiv(B, block_b),)

    kernel = functools.partial(_interaction_kernel, output_dim=output_dim,
                               bilinear_width=C)

    flops = (2 * B * x_dim * (C + output_dim)         # fused x matmul
             + 2 * B * y_dim * output_dim             # y linear matmul
             + 2 * B * C * output_dim                 # selector reduction
             + 2 * B * C)                             # elementwise epilogue
    bytes_accessed = 4 * (B * (x_dim + y_dim + output_dim)
                          + x_dim * (C + output_dim) + y_dim * output_dim
                          + output_dim + C * output_dim)

    def run(weight_mode):
        if weight_mode is None:
            def wspec(shape):
                return pl.BlockSpec(shape, lambda i: (0, 0))
        else:
            def wspec(shape):
                return pl.BlockSpec(shape, lambda i: (0, 0),
                                    pipeline_mode=weight_mode)
        call = pl.pallas_call(
            kernel,
            out_shape=jax.ShapeDtypeStruct((output_dim, B), jnp.float32),
            grid_spec=pltpu.PrefetchScalarGridSpec(
                num_scalar_prefetch=0,
                grid=grid,
                in_specs=[
                    pl.BlockSpec((block_b, x_dim), lambda i: (i, 0)),
                    pl.BlockSpec((block_b, y_dim), lambda i: (i, 0)),
                    wspec((x_dim, C + output_dim)),   # [blockdiag(w_xy)|w_x]
                    wspec((y_dim, output_dim)),       # w_y
                    wspec((1, output_dim)),           # summed biases
                    wspec((C, output_dim)),           # 0/1 selector
                ],
                out_specs=pl.BlockSpec((output_dim, block_b),
                                       lambda i: (0, i)),
            ),
            compiler_params=pltpu.CompilerParams(
                dimension_semantics=("parallel",),
                vmem_limit_bytes=64 * 1024 * 1024),
            cost_estimate=pl.CostEstimate(flops=flops, transcendentals=0,
                                          bytes_accessed=bytes_accessed),
        )
        return call(x, y, wx_slab, wy_w, bias, sel)

    try:
        # Grid-invariant operands only need one VMEM buffer.
        out_t = run(pl.Buffered(1))
    except Exception:  # Pallas build without pipeline_mode=Buffered(1) support
        out_t = run(None)

    return out_t.T                                    # (B, output_dim)


def ref_forward(x, y, params, *, num_heads, output_dim):
    """Pure-JAX transcription of the exact PyTorch forward (view semantics included)."""
    wx_w, wx_b, wy_w, wy_b, w_xy = params
    B, x_dim = x.shape
    _, y_dim = y.shape
    hx = x_dim // num_heads
    hy = y_dim // num_heads
    hi = jax.lax.Precision.HIGHEST
    out = (jnp.dot(x, wx_w, precision=hi) + wx_b
           + jnp.dot(y, wy_w, precision=hi) + wy_b)
    head_x = x.reshape(B, num_heads, hx)
    head_y = y.reshape(B, num_heads, hy)
    t = jnp.matmul(head_x[:, :, None, :],
                   w_xy.reshape(num_heads, hx, -1), precision=hi)
    t = t.reshape(B, num_heads, output_dim, hy)
    xy = jnp.matmul(t, head_y[..., None], precision=hi)[..., 0]  # (B, H, out)
    return out + xy.sum(axis=1)


if __name__ == "__main__":
    B, x_dim, y_dim = 16, 32, 16
    num_heads, output_dim = 2, 4
    hx, hy = x_dim // num_heads, y_dim // num_heads

    key = jax.random.PRNGKey(0)
    kx, ky, k1, k2, k3, k4, k5 = jax.random.split(key, 7)

    x = jax.random.normal(kx, (B, x_dim), jnp.float32)
    y = jax.random.normal(ky, (B, y_dim), jnp.float32)

    # Deterministic synthetic parameters (shapes from the module's __init__).
    wx_w = jax.random.normal(k1, (x_dim, output_dim), jnp.float32) * 0.1
    wx_b = jax.random.normal(k2, (output_dim,), jnp.float32) * 0.1
    wy_w = jax.random.normal(k3, (y_dim, output_dim), jnp.float32) * 0.1
    wy_b = jax.random.normal(k4, (output_dim,), jnp.float32) * 0.1
    xavier_std = (2.0 / (num_heads * hx * hy + output_dim)) ** 0.5
    w_xy = jax.random.normal(k5, (num_heads * hx * hy, output_dim),
                             jnp.float32) * xavier_std
    params = (wx_w, wx_b, wy_w, wy_b, w_xy)

    out = interaction_aggregation(x, y, params,
                                  num_heads=num_heads, output_dim=output_dim)
    out = jax.block_until_ready(out)

    ref = ref_forward(x, y, params, num_heads=num_heads, output_dim=output_dim)
    np.testing.assert_allclose(np.asarray(out), np.asarray(ref),
                               rtol=1e-4, atol=1e-4)
    print("KERNEL_OK")
</pallas_src>

<mosaic_0001>
module attributes {stable_mosaic.version = 11 : i64} {
  func.func @_interaction_kernel(%arg0: i32, %arg1: memref<128x32xf32, #tpu.memory_space<vmem>>, %arg2: memref<128x16xf32, #tpu.memory_space<vmem>>, %arg3: memref<32x68xf32, #tpu.memory_space<vmem>>, %arg4: memref<16x4xf32, #tpu.memory_space<vmem>>, %arg5: memref<1x4xf32, #tpu.memory_space<vmem>>, %arg6: memref<64x4xf32, #tpu.memory_space<vmem>>, %arg7: memref<4x128xf32, #tpu.memory_space<vmem>>) attributes {dimension_semantics = [#tpu.dimension_semantics<parallel>], iteration_bounds = array<i64: 1>, scalar_prefetch = 0 : i64, scratch_operands = 0 : i64, tpu.core_type = #tpu.core_type<tc>, window_params = [{transform_indices = @transform_0, window_bounds = array<i64: 128, 32>}, {transform_indices = @transform_1, window_bounds = array<i64: 128, 16>}, {pipeline_mode = #tpu.pipeline_mode<synchronous>, transform_indices = @transform_2, window_bounds = array<i64: 32, 68>}, {pipeline_mode = #tpu.pipeline_mode<synchronous>, transform_indices = @transform_3, window_bounds = array<i64: 16, 4>}, {pipeline_mode = #tpu.pipeline_mode<synchronous>, transform_indices = @transform_4, window_bounds = array<i64: 1, 4>}, {pipeline_mode = #tpu.pipeline_mode<synchronous>, transform_indices = @transform_5, window_bounds = array<i64: 64, 4>}, {transform_indices = @transform_6, window_bounds = array<i64: 4, 128>}]} {
    %c0 = arith.constant 0 : index
    %c0_0 = arith.constant 0 : index
    %0 = vector.load %arg1[%c0, %c0_0] : memref<128x32xf32, #tpu.memory_space<vmem>>, vector<128x32xf32>
    %c0_1 = arith.constant 0 : index
    %c0_2 = arith.constant 0 : index
    %1 = vector.load %arg2[%c0_1, %c0_2] : memref<128x16xf32, #tpu.memory_space<vmem>>, vector<128x16xf32>
    %c0_3 = arith.constant 0 : index
    %c0_4 = arith.constant 0 : index
    %2 = vector.load %arg3[%c0_3, %c0_4] : memref<32x68xf32, #tpu.memory_space<vmem>>, vector<32x68xf32>
    %cst = arith.constant dense<0.000000e+00> : vector<128x68xf32>
    %3 = tpu.matmul %0, %2, %cst {dimension_numbers = #tpu.dot_dimension_numbers<[1], [0], [0], [1], [0, 0, 1, 1], [], []>} : vector<128x32xf32>, vector<32x68xf32>, vector<128x68xf32> -> vector<128x68xf32>
    %4 = vector.extract_strided_slice %3 {offsets = [0, 0], sizes = [128, 64], strides = [1, 1]} : vector<128x68xf32> to vector<128x64xf32>
    %5 = vector.extract_strided_slice %3 {offsets = [0, 64], sizes = [128, 4], strides = [1, 1]} : vector<128x68xf32> to vector<128x4xf32>
    %c0_5 = arith.constant 0 : index
    %c0_6 = arith.constant 0 : index
    %6 = vector.load %arg4[%c0_5, %c0_6] : memref<16x4xf32, #tpu.memory_space<vmem>>, vector<16x4xf32>
    %cst_7 = arith.constant dense<0.000000e+00> : vector<128x4xf32>
    %7 = tpu.matmul %1, %6, %cst_7 {dimension_numbers = #tpu.dot_dimension_numbers<[1], [0], [0], [1], [0, 0, 1, 1], [], []>} : vector<128x16xf32>, vector<16x4xf32>, vector<128x4xf32> -> vector<128x4xf32>
    %8 = arith.addf %5, %7 : vector<128x4xf32>
    %c0_8 = arith.constant 0 : index
    %c0_9 = arith.constant 0 : index
    %9 = vector.load %arg5[%c0_8, %c0_9] : memref<1x4xf32, #tpu.memory_space<vmem>>, vector<1x4xf32>
    %10 = vector.broadcast %9 : vector<1x4xf32> to vector<128x4xf32>
    %11 = arith.addf %8, %10 : vector<128x4xf32>
    %12 = tpu.concatenate %1, %1, %1, %1 in 1 : vector<128x16xf32>, vector<128x16xf32>, vector<128x16xf32>, vector<128x16xf32> -> vector<128x64xf32>
    %13 = arith.mulf %4, %12 : vector<128x64xf32>
    %c0_10 = arith.constant 0 : index
    %c0_11 = arith.constant 0 : index
    %14 = vector.load %arg6[%c0_10, %c0_11] : memref<64x4xf32, #tpu.memory_space<vmem>>, vector<64x4xf32>
    %cst_12 = arith.constant dense<0.000000e+00> : vector<128x4xf32>
    %15 = tpu.matmul %13, %14, %cst_12 {dimension_numbers = #tpu.dot_dimension_numbers<[1], [0], [0], [1], [0, 0, 1, 1], [], []>} : vector<128x64xf32>, vector<64x4xf32>, vector<128x4xf32> -> vector<128x4xf32>
    %16 = arith.addf %11, %15 : vector<128x4xf32>
    %cst_13 = arith.constant 0.000000e+00 : f32
    %17 = vector.broadcast %cst_13 : f32 to vector<128x124xf32>
    %18 = tpu.concatenate %16, %17 in 1 : vector<128x4xf32>, vector<128x124xf32> -> vector<128x128xf32>
    %19 = tpu.transpose %18, [1, 0] : vector<128x128xf32> -> vector<128x128xf32>
    %20 = vector.extract_strided_slice %19 {offsets = [0, 0], sizes = [4, 128], strides = [1, 1]} : vector<128x128xf32> to vector<4x128xf32>
    %c0_14 = arith.constant 0 : index
    %c0_15 = arith.constant 0 : index
    %21 = vector.load %arg7[%c0_14, %c0_15] : memref<4x128xf32, #tpu.memory_space<vmem>>, vector<4x128xf32>
    tpu.vector_store %arg7[%c0_14, %c0_15], %20 {strides = array<i32>} : memref<4x128xf32, #tpu.memory_space<vmem>>, vector<4x128xf32>,
    return
  }
  func.func @transform_0(%arg0: i32) -> (i32, i32) {
    %c0_i32 = arith.constant 0 : i32
    %c0_i32_0 = arith.constant 0 : i32
    return %arg0, %c0_i32 : i32, i32
  }
  func.func @transform_1(%arg0: i32) -> (i32, i32) {
    %c0_i32 = arith.constant 0 : i32
    %c0_i32_0 = arith.constant 0 : i32
    return %arg0, %c0_i32 : i32, i32
  }
  func.func @transform_2(%arg0: i32) -> (i32, i32) {
    %c0_i32 = arith.constant 0 : i32
    %c0_i32_0 = arith.constant 0 : i32
    %c0_i32_1 = arith.constant 0 : i32
    return %c0_i32, %c0_i32_0 : i32, i32
  }
  func.func @transform_3(%arg0: i32) -> (i32, i32) {
    %c0_i32 = arith.constant 0 : i32
    %c0_i32_0 = arith.constant 0 : i32
    %c0_i32_1 = arith.constant 0 : i32
    return %c0_i32, %c0_i32_0 : i32, i32
  }
  func.func @transform_4(%arg0: i32) -> (i32, i32) {
    %c0_i32 = arith.constant 0 : i32
    %c0_i32_0 = arith.constant 0 : i32
    %c0_i32_1 = arith.constant 0 : i32
    return %c0_i32, %c0_i32_0 : i32, i32
  }
  func.func @transform_5(%arg0: i32) -> (i32, i32) {
    %c0_i32 = arith.constant 0 : i32
    %c0_i32_0 = arith.constant 0 : i32
    %c0_i32_1 = arith.constant 0 : i32
    return %c0_i32, %c0_i32_0 : i32, i32
  }
  func.func @transform_6(%arg0: i32) -> (i32, i32) {
    %c0_i32 = arith.constant 0 : i32
    %c0_i32_0 = arith.constant 0 : i32
    return %c0_i32, %arg0 : i32, i32
  }
}

module attributes {stable_mosaic.version = 11 : i64} {
  func.func @_interaction_kernel(%arg0: i32, %arg1: memref<128x32xf32, #tpu.memory_space<vmem>>, %arg2: memref<128x16xf32, #tpu.memory_space<vmem>>, %arg3: memref<32x68xf32, #tpu.memory_space<vmem>>, %arg4: memref<16x4xf32, #tpu.memory_space<vmem>>, %arg5: memref<1x4xf32, #tpu.memory_space<vmem>>, %arg6: memref<64x4xf32, #tpu.memory_space<vmem>>, %arg7: memref<4x128xf32, #tpu.memory_space<vmem>>) attributes {dimension_semantics = [#tpu.dimension_semantics<parallel>], iteration_bounds = array<i64: 1>, scalar_prefetch = 0 : i64, scratch_operands = 0 : i64, tpu.core_type = #tpu.core_type<tc>, window_params = [{transform_indices = @transform_0, window_bounds = array<i64: 128, 32>}, {transform_indices = @transform_1, window_bounds = array<i64: 128, 16>}, {pipeline_mode = #tpu.pipeline_mode<synchronous>, transform_indices = @transform_2, window_bounds = array<i64: 32, 68>}, {pipeline_mode = #tpu.pipeline_mode<synchronous>, transform_indices = @transform_3, window_bounds = array<i64: 16, 4>}, {pipeline_mode = #tpu.pipeline_mode<synchronous>, transform_indices = @transform_4, window_bounds = array<i64: 1, 4>}, {pipeline_mode = #tpu.pipeline_mode<synchronous>, transform_indices = @transform_5, window_bounds = array<i64: 64, 4>}, {transform_indices = @transform_6, window_bounds = array<i64: 4, 128>}]} {
    %c0 = arith.constant 0 : index
    %c0_0 = arith.constant 0 : index
    %0 = vector.load %arg1[%c0, %c0_0] : memref<128x32xf32, #tpu.memory_space<vmem>>, vector<128x32xf32>
    %c0_1 = arith.constant 0 : index
    %c0_2 = arith.constant 0 : index
    %1 = vector.load %arg2[%c0_1, %c0_2] : memref<128x16xf32, #tpu.memory_space<vmem>>, vector<128x16xf32>
    %c0_3 = arith.constant 0 : index
    %c0_4 = arith.constant 0 : index
    %2 = vector.load %arg3[%c0_3, %c0_4] : memref<32x68xf32, #tpu.memory_space<vmem>>, vector<32x68xf32>
    %cst = arith.constant dense<0.000000e+00> : vector<128x68xf32>
    %3 = tpu.matmul %0, %2, %cst {dimension_numbers = #tpu.dot_dimension_numbers<[1], [0], [0], [1], [0, 0, 1, 1], [], []>} : vector<128x32xf32>, vector<32x68xf32>, vector<128x68xf32> -> vector<128x68xf32>
    %4 = vector.extract_strided_slice %3 {offsets = [0, 0], sizes = [128, 64], strides = [1, 1]} : vector<128x68xf32> to vector<128x64xf32>
    %5 = vector.extract_strided_slice %3 {offsets = [0, 64], sizes = [128, 4], strides = [1, 1]} : vector<128x68xf32> to vector<128x4xf32>
    %c0_5 = arith.constant 0 : index
    %c0_6 = arith.constant 0 : index
    %6 = vector.load %arg4[%c0_5, %c0_6] : memref<16x4xf32, #tpu.memory_space<vmem>>, vector<16x4xf32>
    %cst_7 = arith.constant dense<0.000000e+00> : vector<128x4xf32>
    %7 = tpu.matmul %1, %6, %cst_7 {dimension_numbers = #tpu.dot_dimension_numbers<[1], [0], [0], [1], [0, 0, 1, 1], [], []>} : vector<128x16xf32>, vector<16x4xf32>, vector<128x4xf32> -> vector<128x4xf32>
    %8 = arith.addf %5, %7 : vector<128x4xf32>
    %c0_8 = arith.constant 0 : index
    %c0_9 = arith.constant 0 : index
    %9 = vector.load %arg5[%c0_8, %c0_9] : memref<1x4xf32, #tpu.memory_space<vmem>>, vector<1x4xf32>
    %10 = vector.broadcast %9 : vector<1x4xf32> to vector<128x4xf32>
    %11 = arith.addf %8, %10 : vector<128x4xf32>
    %12 = tpu.concatenate %1, %1, %1, %1 in 1 : vector<128x16xf32>, vector<128x16xf32>, vector<128x16xf32>, vector<128x16xf32> -> vector<128x64xf32>
    %13 = arith.mulf %4, %12 : vector<128x64xf32>
    %c0_10 = arith.constant 0 : index
    %c0_11 = arith.constant 0 : index
    %14 = vector.load %arg6[%c0_10, %c0_11] : memref<64x4xf32, #tpu.memory_space<vmem>>, vector<64x4xf32>
    %cst_12 = arith.constant dense<0.000000e+00> : vector<128x4xf32>
    %15 = tpu.matmul %13, %14, %cst_12 {dimension_numbers = #tpu.dot_dimension_numbers<[1], [0], [0], [1], [0, 0, 1, 1], [], []>} : vector<128x64xf32>, vector<64x4xf32>, vector<128x4xf32> -> vector<128x4xf32>
    %16 = arith.addf %11, %15 : vector<128x4xf32>
    %cst_13 = arith.constant 0.000000e+00 : f32
    %17 = vector.broadcast %cst_13 : f32 to vector<128x124xf32>
    %18 = tpu.concatenate %16, %17 in 1 : vector<128x4xf32>, vector<128x124xf32> -> vector<128x128xf32>
    %19 = tpu.transpose %18, [1, 0] : vector<128x128xf32> -> vector<128x128xf32>
    %20 = vector.extract_strided_slice %19 {offsets = [0, 0], sizes = [4, 128], strides = [1, 1]} : vector<128x128xf32> to vector<4x128xf32>
    %c0_14 = arith.constant 0 : index
    %c0_15 = arith.constant 0 : index
    %21 = vector.load %arg7[%c0_14, %c0_15] : memref<4x128xf32, #tpu.memory_space<vmem>>, vector<4x128xf32>
    tpu.vector_store %arg7[%c0_14, %c0_15], %20 {strides = array<i32>} : memref<4x128xf32, #tpu.memory_space<vmem>>, vector<4x128xf32>,
    return
  }
  func.func @transform_0(%arg0: i32) -> (i32, i32) {
    %c0_i32 = arith.constant 0 : i32
    %c0_i32_0 = arith.constant 0 : i32
    return %arg0, %c0_i32 : i32, i32
  }
  func.func @transform_1(%arg0: i32) -> (i32, i32) {
    %c0_i32 = arith.constant 0 : i32
    %c0_i32_0 = arith.constant 0 : i32
    return %arg0, %c0_i32 : i32, i32
  }
  func.func @transform_2(%arg0: i32) -> (i32, i32) {
    %c0_i32 = arith.constant 0 : i32
    %c0_i32_0 = arith.constant 0 : i32
    %c0_i32_1 = arith.constant 0 : i32
    return %c0_i32, %c0_i32_0 : i32, i32
  }
  func.func @transform_3(%arg0: i32) -> (i32, i32) {
    %c0_i32 = arith.constant 0 : i32
    %c0_i32_0 = arith.constant 0 : i32
    %c0_i32_1 = arith.constant 0 : i32
    return %c0_i32, %c0_i32_0 : i32, i32
  }
  func.func @transform_4(%arg0: i32) -> (i32, i32) {
    %c0_i32 = arith.constant 0 : i32
    %c0_i32_0 = arith.constant 0 : i32
    %c0_i32_1 = arith.constant 0 : i32
    return %c0_i32, %c0_i32_0 : i32, i32
  }
  func.func @transform_5(%arg0: i32) -> (i32, i32) {
    %c0_i32 = arith.constant 0 : i32
    %c0_i32_0 = arith.constant 0 : i32
    %c0_i32_1 = arith.constant 0 : i32
    return %c0_i32, %c0_i32_0 : i32, i32
  }
  func.func @transform_6(%arg0: i32) -> (i32, i32) {
    %c0_i32 = arith.constant 0 : i32
    %c0_i32_0 = arith.constant 0 : i32
    return %c0_i32, %arg0 : i32, i32
  }
}

</mosaic_0001>

<llo_original>
// kernel: tpu_custom_call.1
$region0: #{tpu_custom_call.1}
  #allocation0 [shape = 'u32[]', space=smem, size = 0x4, offset = 0x4, fixed_abs, tag = 'smem constant byte address 0x4 - core index']
  #allocation1 [shape = 'u32[144,128]{1,0:T(1,128)}', space=vmem, size = 0x12000, scoped, tag = 'internal scratch']
  %s0 = inlined_call_operand.hbm [shape: f32[16,32], index: 0, kind: input, shape index: {}]
  %s1 = inlined_call_operand.hbm [shape: f32[16,16], index: 1, kind: input, shape index: {}]
  %s2 = inlined_call_operand.hbm [shape: f32[32,68], index: 2, kind: input, shape index: {}]
  %s3 = inlined_call_operand.hbm [shape: f32[16,4], index: 3, kind: input, shape index: {}]
  %s4 = inlined_call_operand.hbm [shape: f32[1,4], index: 4, kind: input, shape index: {}]
  %s5 = inlined_call_operand.hbm [shape: f32[64,4], index: 5, kind: input, shape index: {}]
  %s6 = inlined_call_operand.hbm [shape: f32[4,16], index: 6, kind: output, shape index: {}]
  %s7 = sld [smem:[#allocation0]]
  $region58: #{tpu_custom_call.1} parent=0
    _
  %s9 = ssub.s32 1, %s7
  %s10 = scalar_select 0, %s9, %s7
  $region1: #{tpu_custom_call.1} parent=0
    #allocation2 [shape = 'u8[65536]{0}', space=vmem, size = 0x10000, scoped, tag = 'input window, operand 0, single buffered']
    #allocation3 [shape = 's32[1]{0}', space=sflag, size = 0x4, scoped, tag = 'scoped memory for tpu_custom_call.1']
    #allocation4 [shape = 's32[1]{0}', space=sflag, size = 0x4, scoped, tag = 'scoped memory for tpu_custom_call.1']
    #allocation5 [shape = 'u8[65536]{0}', space=vmem, size = 0x10000, scoped, tag = 'input window, operand 1, single buffered']
    #allocation6 [shape = 's32[1]{0}', space=sflag, size = 0x4, scoped, tag = 'scoped memory for tpu_custom_call.1']
    #allocation7 [shape = 'u8[16384]{0}', space=vmem, size = 0x4000, scoped, tag = 'input window, operand 2, single buffered']
    #allocation8 [shape = 'u8[8192]{0}', space=vmem, size = 0x2000, scoped, tag = 'input window, operand 3, single buffered']
    #allocation9 [shape = 's32[1]{0}', space=sflag, size = 0x4, scoped, tag = 'scoped memory for tpu_custom_call.1']
    #allocation10 [shape = 'u8[512]{0}', space=vmem, size = 0x400, scoped, tag = 'input window, operand 4, single buffered']
    #allocation11 [shape = 'u8[32768]{0}', space=vmem, size = 0x8000, scoped, tag = 'input window, operand 5, single buffered']
    #allocation12 [shape = 's32[1]{0}', space=sflag, size = 0x4, scoped, tag = 'scoped memory for tpu_custom_call.1']
    #allocation13 [shape = 'u8[2048]{0}', space=vmem, size = 0x800, scoped, tag = 'output window, operand 0, single buffered']
    %11 = vsyncpa [#allocation3], 0
    %12 = vsyncpa [#allocation6], 0
    %13 = vsyncpa [#allocation9], 0
    %14 = vsyncpa [#allocation12], 0
    %15 = vsyncpa [#allocation4], 0
    // Predicated region
    $region2: #{tpu_custom_call.1} parent=1 // pred_check
      _
    $region3: #{tpu_custom_call.1} parent=1 // pred_check_branch
      %17 = sbr.rel (0) target = $region5
    $region4: #{tpu_custom_call.1} parent=1 // pred_region
      %s19 = ssub.s32 2048, 256
      %20 = vsyncadd [#allocation3], %s19
      %s21 = sshll.u32 [#allocation2], 4
      %s22 = int_to_ptr.vmem [resolvable:$true] %s21
      %27 = dma.hbm_to_vmem [thread:$0]  %s0, 256, %s22, [#allocation3], 128, 128, 8
    $region5: #{tpu_custom_call.1} parent=1 // pred_fallthru
      _
    // Predicated region
    $region6: #{tpu_custom_call.1} parent=1 // pred_check
      _
    $region7: #{tpu_custom_call.1} parent=1 // pred_check_branch
      %29 = sbr.rel (0) target = $region9
    $region8: #{tpu_custom_call.1} parent=1 // pred_region
      %s31 = ssub.s32 2048, 256
      %32 = vsyncadd [#allocation6], %s31
      %s33 = sshll.u32 [#allocation5], 4
      %s34 = int_to_ptr.vmem [resolvable:$true] %s33
      %39 = dma.hbm_to_vmem [thread:$0]  %s1, 256, %s34, [#allocation6], 128, 128, 8
    $region9: #{tpu_custom_call.1} parent=1 // pred_fallthru
      _
    // Predicated region
    $region10: #{tpu_custom_call.1} parent=1 // pred_check
      _
    $region11: #{tpu_custom_call.1} parent=1 // pred_check_branch
      %41 = sbr.rel (0) target = $region13
    $region12: #{tpu_custom_call.1} parent=1 // pred_region
      %s43 = ssub.s32 512, 512
      %44 = vsyncadd [#allocation6], %s43
      %s45 = sshll.u32 [#allocation7], 4
      %s46 = int_to_ptr.vmem [resolvable:$true] %s45
      %51 = dma.hbm_to_vmem [thread:$0]  %s2, 512, %s46, [#allocation6], 128, 128, 8
    $region13: #{tpu_custom_call.1} parent=1 // pred_fallthru
      _
    // Predicated region
    $region14: #{tpu_custom_call.1} parent=1 // pred_check
      _
    $region15: #{tpu_custom_call.1} parent=1 // pred_check_branch
      %53 = sbr.rel (0) target = $region17
    $region16: #{tpu_custom_call.1} parent=1 // pred_region
      %s55 = ssub.s32 256, 256
      %56 = vsyncadd [#allocation9], %s55
      %s57 = sshll.u32 [#allocation8], 4
      %s58 = int_to_ptr.vmem [resolvable:$true] %s57
      %63 = dma.hbm_to_vmem [thread:$0]  %s3, 256, %s58, [#allocation9], 128, 128, 8
    $region17: #{tpu_custom_call.1} parent=1 // pred_fallthru
      _
    // Predicated region
    $region18: #{tpu_custom_call.1} parent=1 // pred_check
      _
    $region19: #{tpu_custom_call.1} parent=1 // pred_check_branch
      %65 = sbr.rel (0) target = $region21
    $region20: #{tpu_custom_call.1} parent=1 // pred_region
      %s67 = ssub.s32 16, 16
      %68 = vsyncadd [#allocation9], %s67
      %s70 = sshll.u32 [#allocation10], 4
      %s71 = int_to_ptr.vmem [resolvable:$true] %s70
      %73 = dma.hbm_to_vmem [thread:$0]  %s4, 16, %s71, [#allocation9]
    $region21: #{tpu_custom_call.1} parent=1 // pred_fallthru
      _
    // Predicated region
    $region22: #{tpu_custom_call.1} parent=1 // pred_check
      _
    $region23: #{tpu_custom_call.1} parent=1 // pred_check_branch
      %75 = sbr.rel (0) target = $region25
    $region24: #{tpu_custom_call.1} parent=1 // pred_region
      %s77 = ssub.s32 1024, 1024
      %78 = vsyncadd [#allocation12], %s77
      %s79 = sshll.u32 [#allocation11], 4
      %s80 = int_to_ptr.vmem [resolvable:$true] %s79
      %85 = dma.hbm_to_vmem [thread:$0]  %s5, 1024, %s80, [#allocation12], 128, 128, 8
    $region25: #{tpu_custom_call.1} parent=1 // pred_fallthru
      _
    // Predicated region
    $region26: #{tpu_custom_call.1} parent=1 // pred_check
      _
    $region27: #{tpu_custom_call.1} parent=1 // pred_check_branch
      %87 = sbr.rel (0) target = $region29
    $region28: #{tpu_custom_call.1} parent=1 // pred_region
      %88 = dma.done [#allocation3], 2048
    $region29: #{tpu_custom_call.1} parent=1 // pred_fallthru
      _
    // Predicated region
    $region30: #{tpu_custom_call.1} parent=1 // pred_check
      _
    $region31: #{tpu_custom_call.1} parent=1 // pred_check_branch
      %90 = sbr.rel (0) target = $region33
    $region32: #{tpu_custom_call.1} parent=1 // pred_region
      %91 = dma.done [#allocation6], 2048
    $region33: #{tpu_custom_call.1} parent=1 // pred_fallthru
      _
    // Predicated region
    $region34: #{tpu_custom_call.1} parent=1 // pred_check
      _
    $region35: #{tpu_custom_call.1} parent=1 // pred_check_branch
      %93 = sbr.rel (0) target = $region37
    $region36: #{tpu_custom_call.1} parent=1 // pred_region
      %94 = dma.done [#allocation6], 512
    $region37: #{tpu_custom_call.1} parent=1 // pred_fallthru
      _
    // Predicated region
    $region38: #{tpu_custom_call.1} parent=1 // pred_check
      _
    $region39: #{tpu_custom_call.1} parent=1 // pred_check_branch
      %96 = sbr.rel (0) target = $region41
    $region40: #{tpu_custom_call.1} parent=1 // pred_region
      %97 = dma.done [#allocation9], 256
    $region41: #{tpu_custom_call.1} parent=1 // pred_fallthru
      _
    // Predicated region
    $region42: #{tpu_custom_call.1} parent=1 // pred_check
      _
    $region43: #{tpu_custom_call.1} parent=1 // pred_check_branch
      %99 = sbr.rel (0) target = $region45
    $region44: #{tpu_custom_call.1} parent=1 // pred_region
      %100 = dma.done [#allocation9], 16
    $region45: #{tpu_custom_call.1} parent=1 // pred_fallthru
      _
    // Predicated region
    $region46: #{tpu_custom_call.1} parent=1 // pred_check
      _
    $region47: #{tpu_custom_call.1} parent=1 // pred_check_branch
      %102 = sbr.rel (0) target = $region49
    $region48: #{tpu_custom_call.1} parent=1 // pred_region
      %103 = dma.done [#allocation12], 1024
    $region49: #{tpu_custom_call.1} parent=1 // pred_fallthru
      _
    %v104 = vld [vmem:[#allocation2] sm:$0xff]
    %v105 = vld [vmem:[#allocation2 + $0x8] sm:$0xff]
    %v106 = vld [vmem:[#allocation2 + $0x10] sm:$0xff]
    %v107 = vld [vmem:[#allocation2 + $0x18] sm:$0xff]
    %v108 = vld [vmem:[#allocation2 + $0x20] sm:$0xff]
    %v109 = vld [vmem:[#allocation2 + $0x28] sm:$0xff]
    %v110 = vld [vmem:[#allocation2 + $0x30] sm:$0xff]
    %v111 = vld [vmem:[#allocation2 + $0x38] sm:$0xff]
    %v112 = vld [vmem:[#allocation2 + $0x40] sm:$0xff]
    %v113 = vld [vmem:[#allocation2 + $0x48] sm:$0xff]
    %v114 = vld [vmem:[#allocation2 + $0x50] sm:$0xff]
    %v115 = vld [vmem:[#allocation2 + $0x58] sm:$0xff]
    %v116 = vld [vmem:[#allocation2 + $0x60] sm:$0xff]
    %v117 = vld [vmem:[#allocation2 + $0x68] sm:$0xff]
    %v118 = vld [vmem:[#allocation2 + $0x70] sm:$0xff]
    %v119 = vld [vmem:[#allocation2 + $0x78] sm:$0xff]
    %v120 = vld [vmem:[#allocation5] sm:$0xff]
    %v121 = vld [vmem:[#allocation5 + $0x8] sm:$0xff]
    %v122 = vld [vmem:[#allocation5 + $0x10] sm:$0xff]
    %v123 = vld [vmem:[#allocation5 + $0x18] sm:$0xff]
    %v124 = vld [vmem:[#allocation5 + $0x20] sm:$0xff]
    %v125 = vld [vmem:[#allocation5 + $0x28] sm:$0xff]
    %v126 = vld [vmem:[#allocation5 + $0x30] sm:$0xff]
    %v127 = vld [vmem:[#allocation5 + $0x38] sm:$0xff]
    %v128 = vld [vmem:[#allocation5 + $0x40] sm:$0xff]
    %v129 = vld [vmem:[#allocation5 + $0x48] sm:$0xff]
    %v130 = vld [vmem:[#allocation5 + $0x50] sm:$0xff]
    %v131 = vld [vmem:[#allocation5 + $0x58] sm:$0xff]
    %v132 = vld [vmem:[#allocation5 + $0x60] sm:$0xff]
    %v133 = vld [vmem:[#allocation5 + $0x68] sm:$0xff]
    %v134 = vld [vmem:[#allocation5 + $0x70] sm:$0xff]
    %v135 = vld [vmem:[#allocation5 + $0x78] sm:$0xff]
    %v136 = vld [vmem:[#allocation7] sm:$0xff]
    %v137 = vld [vmem:[#allocation7 + $0x8] sm:$0xff]
    %v138 = vld [vmem:[#allocation7 + $0x10] sm:$0xff]
    %v139 = vld [vmem:[#allocation7 + $0x18] sm:$0xff]
    %vm140 = vcmask 261120
    %v142 = vsel %vm140, %v104, 0
    %v145 = vsel %vm140, %v105, 0
    %v148 = vsel %vm140, %v106, 0
    %v151 = vsel %vm140, %v107, 0
    %v154 = vsel %vm140, %v108, 0
    %v157 = vsel %vm140, %v109, 0
    %v160 = vsel %vm140, %v110, 0
    %v163 = vsel %vm140, %v111, 0
    %v166 = vsel %vm140, %v112, 0
    %v169 = vsel %vm140, %v113, 0
    %v172 = vsel %vm140, %v114, 0
    %v175 = vsel %vm140, %v115, 0
    %v178 = vsel %vm140, %v116, 0
    %v181 = vsel %vm140, %v117, 0
    %v184 = vsel %vm140, %v118, 0
    %v187 = vsel %vm140, %v119, 0
    %189 = vmatprep.subr.mxu0 0.0
    %190 = vmatpush1.msra.mxu0 %v136
    %191 = vmatprep.subr.mxu0 0.0
    %192 = vmatpush1.msra.mxu0 %v137
    %193 = vmatprep.subr.mxu0 0.0
    %194 = vmatpush1.msra.mxu0 %v138
    %195 = vmatprep.subr.mxu0 0.0
    %196 = vmatpush1.msra.mxu0 %v139
    %197 = vmatprep.subr.mxu0 0.0
    %198 = vmatpush1.msra.mxu0 0.0
    %199 = vmatprep.subr.mxu0 0.0
    %200 = vmatpush1.msra.mxu0 0.0
    %201 = vmatprep.subr.mxu0 0.0
    %202 = vmatpush1.msra.mxu0 0.0
    %203 = vmatprep.subr.mxu0 0.0
    %204 = vmatpush1.msra.mxu0 0.0
    %205 = vmatprep.subr.mxu0 0.0
    %206 = vmatpush1.msra.mxu0 0.0
    %207 = vmatprep.subr.mxu0 0.0
    %208 = vmatpush1.msra.mxu0 0.0
    %209 = vmatprep.subr.mxu0 0.0
    %210 = vmatpush1.msra.mxu0 0.0
    %211 = vmatprep.subr.mxu0 0.0
    %212 = vmatpush1.msra.mxu0 0.0
    %213 = vmatprep.subr.mxu0 0.0
    %214 = vmatpush1.msra.mxu0 0.0
    %215 = vmatprep.subr.mxu0 0.0
    %216 = vmatpush1.msra.mxu0 0.0
    %217 = vmatprep.subr.mxu0 0.0
    %218 = vmatpush1.msra.mxu0 0.0
    %219 = vmatprep.subr.mxu0 0.0
    %220 = vmatpush1.msra.mxu0 0.0
    %221 = vmatprep.subr.mxu0 0.0
    %222 = vmatpush1.msra.mxu0 0.0
    %223 = vmatprep.subr.mxu0 0.0
    %224 = vmatpush1.msra.mxu0 0.0
    %225 = vmatprep.subr.mxu0 0.0
    %226 = vmatpush1.msra.mxu0 0.0
    %227 = vmatprep.subr.mxu0 0.0
    %228 = vmatpush1.msra.mxu0 0.0
    %229 = vmatprep.subr.mxu0 0.0
    %230 = vmatpush1.msra.mxu0 0.0
    %231 = vmatprep.subr.mxu0 0.0
    %232 = vmatpush1.msra.mxu0 0.0
    %233 = vmatprep.subr.mxu0 0.0
    %234 = vmatpush1.msra.mxu0 0.0
    %235 = vmatprep.subr.mxu0 0.0
    %236 = vmatpush1.msra.mxu0 0.0
    %237 = vmatprep.subr.mxu0 0.0
    %238 = vmatpush1.msra.mxu0 0.0
    %239 = vmatprep.subr.mxu0 0.0
    %240 = vmatpush1.msra.mxu0 0.0
    %241 = vmatprep.subr.mxu0 0.0
    %242 = vmatpush1.msra.mxu0 0.0
    %243 = vmatprep.subr.mxu0 0.0
    %244 = vmatpush1.msra.mxu0 0.0
    %245 = vmatprep.subr.mxu0 0.0
    %246 = vmatpush1.msra.mxu0 0.0
    %247 = vmatprep.subr.mxu0 0.0
    %248 = vmatpush1.msra.mxu0 0.0
    %249 = vmatprep.subr.mxu0 0.0
    %250 = vmatpush1.msra.mxu0 0.0
    %251 = vmatprep.subr.mxu0 0.0
    %252 = vmatpush1.msra.mxu0 0.0
    %253 = vmatprep.mubr.f32.mxu0 0.0
    %254 = vmatmul.mubr.f32.gmra.mrb[0].mxu0 %v142
    %v255 = vpop.f32.mrb[0].mxu0
    %v256 = vadd.f32 0.0, %v255
    %v257 = vpop.f32.mrb[0].mxu0
    %258 = vmatprep.mubr.f32.mxu0 0.0
    %259 = vmatmul.mubr.f32.gmra.mrb[0].mxu0 %v145
    %v260 = vpop.f32.mrb[0].mxu0
    %v261 = vadd.f32 0.0, %v260
    %v262 = vpop.f32.mrb[0].mxu0
    %263 = vmatprep.mubr.f32.mxu0 0.0
    %264 = vmatmul.mubr.f32.gmra.mrb[0].mxu0 %v148
    %v265 = vpop.f32.mrb[0].mxu0
    %v266 = vadd.f32 0.0, %v265
    %v267 = vpop.f32.mrb[0].mxu0
    %268 = vmatprep.mubr.f32.mxu0 0.0
    %269 = vmatmul.mubr.f32.gmra.mrb[0].mxu0 %v151
    %v270 = vpop.f32.mrb[0].mxu0
    %v271 = vadd.f32 0.0, %v270
    %v272 = vpop.f32.mrb[0].mxu0
    %273 = vmatprep.mubr.f32.mxu0 0.0
    %274 = vmatmul.mubr.f32.gmra.mrb[0].mxu0 %v154
    %v275 = vpop.f32.mrb[0].mxu0
    %v276 = vadd.f32 0.0, %v275
    %v277 = vpop.f32.mrb[0].mxu0
    %278 = vmatprep.mubr.f32.mxu0 0.0
    %279 = vmatmul.mubr.f32.gmra.mrb[0].mxu0 %v157
    %v280 = vpop.f32.mrb[0].mxu0
    %v281 = vadd.f32 0.0, %v280
    %v282 = vpop.f32.mrb[0].mxu0
    %283 = vmatprep.mubr.f32.mxu0 0.0
    %284 = vmatmul.mubr.f32.gmra.mrb[0].mxu0 %v160
    %v285 = vpop.f32.mrb[0].mxu0
    %v286 = vadd.f32 0.0, %v285
    %v287 = vpop.f32.mrb[0].mxu0
    %288 = vmatprep.mubr.f32.mxu0 0.0
    %289 = vmatmul.mubr.f32.gmra.mrb[0].mxu0 %v163
    %v290 = vpop.f32.mrb[0].mxu0
    %v291 = vadd.f32 0.0, %v290
    %v292 = vpop.f32.mrb[0].mxu0
    %293 = vmatprep.mubr.f32.mxu0 0.0
    %294 = vmatmul.mubr.f32.gmra.mrb[0].mxu0 %v166
    %v295 = vpop.f32.mrb[0].mxu0
    %v296 = vadd.f32 0.0, %v295
    %v297 = vpop.f32.mrb[0].mxu0
    %298 = vmatprep.mubr.f32.mxu0 0.0
    %299 = vmatmul.mubr.f32.gmra.mrb[0].mxu0 %v169
    %v300 = vpop.f32.mrb[0].mxu0
    %v301 = vadd.f32 0.0, %v300
    %v302 = vpop.f32.mrb[0].mxu0
    %303 = vmatprep.mubr.f32.mxu0 0.0
    %304 = vmatmul.mubr.f32.gmra.mrb[0].mxu0 %v172
    %v305 = vpop.f32.mrb[0].mxu0
    %v306 = vadd.f32 0.0, %v305
    %v307 = vpop.f32.mrb[0].mxu0
    %308 = vmatprep.mubr.f32.mxu0 0.0
    %309 = vmatmul.mubr.f32.gmra.mrb[0].mxu0 %v175
    %v310 = vpop.f32.mrb[0].mxu0
    %v311 = vadd.f32 0.0, %v310
    %v312 = vpop.f32.mrb[0].mxu0
    %313 = vmatprep.mubr.f32.mxu0 0.0
    %314 = vmatmul.mubr.f32.gmra.mrb[0].mxu0 %v178
    %v315 = vpop.f32.mrb[0].mxu0
    %v316 = vadd.f32 0.0, %v315
    %v317 = vpop.f32.mrb[0].mxu0
    %318 = vmatprep.mubr.f32.mxu0 0.0
    %319 = vmatmul.mubr.f32.gmra.mrb[0].mxu0 %v181
    %v320 = vpop.f32.mrb[0].mxu0
    %v321 = vadd.f32 0.0, %v320
    %v322 = vpop.f32.mrb[0].mxu0
    %323 = vmatprep.mubr.f32.mxu0 0.0
    %324 = vmatmul.mubr.f32.gmra.mrb[0].mxu0 %v184
    %v325 = vpop.f32.mrb[0].mxu0
    %v326 = vadd.f32 0.0, %v325
    %v327 = vpop.f32.mrb[0].mxu0
    %328 = vmatprep.mubr.f32.mxu0 0.0
    %329 = vmatmul.mubr.f32.gmra.mrb[0].mxu0 %v187
    %v330 = vpop.f32.mrb[0].mxu0
    %v331 = vadd.f32 0.0, %v330
    %v332 = vpop.f32.mrb[0].mxu0
    %333 = vdwg.mxu0
    %v334 = vld [vmem:[#allocation8] sm:$0xff]
    %v335 = vld [vmem:[#allocation8 + $0x8] sm:$0xff]
    %vm336 = vcmask 130048
    %v338 = vsel %vm336, %v120, 0
    %v341 = vsel %vm336, %v121, 0
    %v344 = vsel %vm336, %v122, 0
    %v347 = vsel %vm336, %v123, 0
    %v350 = vsel %vm336, %v124, 0
    %v353 = vsel %vm336, %v125, 0
    %v356 = vsel %vm336, %v126, 0
    %v359 = vsel %vm336, %v127, 0
    %v362 = vsel %vm336, %v128, 0
    %v365 = vsel %vm336, %v129, 0
    %v368 = vsel %vm336, %v130, 0
    %v371 = vsel %vm336, %v131, 0
    %v374 = vsel %vm336, %v132, 0
    %v377 = vsel %vm336, %v133, 0
    %v380 = vsel %vm336, %v134, 0
    %v383 = vsel %vm336, %v135, 0
    %385 = vmatprep.subr.mxu0 0.0
    %386 = vmatpush1.msra.mxu0 %v334
    %387 = vmatprep.subr.mxu0 0.0
    %388 = vmatpush1.msra.mxu0 %v335
    %389 = vmatprep.subr.mxu0 0.0
    %390 = vmatpush1.msra.mxu0 0.0
    %391 = vmatprep.subr.mxu0 0.0
    %392 = vmatpush1.msra.mxu0 0.0
    %393 = vmatprep.subr.mxu0 0.0
    %394 = vmatpush1.msra.mxu0 0.0
    %395 = vmatprep.subr.mxu0 0.0
    %396 = vmatpush1.msra.mxu0 0.0
    %397 = vmatprep.subr.mxu0 0.0
    %398 = vmatpush1.msra.mxu0 0.0
    %399 = vmatprep.subr.mxu0 0.0
    %400 = vmatpush1.msra.mxu0 0.0
    %401 = vmatprep.subr.mxu0 0.0
    %402 = vmatpush1.msra.mxu0 0.0
    %403 = vmatprep.subr.mxu0 0.0
    %404 = vmatpush1.msra.mxu0 0.0
    %405 = vmatprep.subr.mxu0 0.0
    %406 = vmatpush1.msra.mxu0 0.0
    %407 = vmatprep.subr.mxu0 0.0
    %408 = vmatpush1.msra.mxu0 0.0
    %409 = vmatprep.subr.mxu0 0.0
    %410 = vmatpush1.msra.mxu0 0.0
    %411 = vmatprep.subr.mxu0 0.0
    %412 = vmatpush1.msra.mxu0 0.0
    %413 = vmatprep.subr.mxu0 0.0
    %414 = vmatpush1.msra.mxu0 0.0
    %415 = vmatprep.subr.mxu0 0.0
    %416 = vmatpush1.msra.mxu0 0.0
    %417 = vmatprep.subr.mxu0 0.0
    %418 = vmatpush1.msra.mxu0 0.0
    %419 = vmatprep.subr.mxu0 0.0
    %420 = vmatpush1.msra.mxu0 0.0
    %421 = vmatprep.subr.mxu0 0.0
    %422 = vmatpush1.msra.mxu0 0.0
    %423 = vmatprep.subr.mxu0 0.0
    %424 = vmatpush1.msra.mxu0 0.0
    %425 = vmatprep.subr.mxu0 0.0
    %426 = vmatpush1.msra.mxu0 0.0
    %427 = vmatprep.subr.mxu0 0.0
    %428 = vmatpush1.msra.mxu0 0.0
    %429 = vmatprep.subr.mxu0 0.0
    %430 = vmatpush1.msra.mxu0 0.0
    %431 = vmatprep.subr.mxu0 0.0
    %432 = vmatpush1.msra.mxu0 0.0
    %433 = vmatprep.subr.mxu0 0.0
    %434 = vmatpush1.msra.mxu0 0.0
    %435 = vmatprep.subr.mxu0 0.0
    %436 = vmatpush1.msra.mxu0 0.0
    %437 = vmatprep.subr.mxu0 0.0
    %438 = vmatpush1.msra.mxu0 0.0
    %439 = vmatprep.subr.mxu0 0.0
    %440 = vmatpush1.msra.mxu0 0.0
    %441 = vmatprep.subr.mxu0 0.0
    %442 = vmatpush1.msra.mxu0 0.0
    %443 = vmatprep.subr.mxu0 0.0
    %444 = vmatpush1.msra.mxu0 0.0
    %445 = vmatprep.subr.mxu0 0.0
    %446 = vmatpush1.msra.mxu0 0.0
    %447 = vmatprep.subr.mxu0 0.0
    %448 = vmatpush1.msra.mxu0 0.0
    %449 = vmatprep.mubr.f32.mxu0 0.0
    %450 = vmatmul.mubr.f32.gmra.mrb[0].mxu0 %v338
    %v451 = vpop.f32.mrb[0].mxu0
    %v452 = vadd.f32 0.0, %v451
    %v453 = vpop.f32.mrb[0].mxu0
    %454 = vmatprep.mubr.f32.mxu0 0.0
    %455 = vmatmul.mubr.f32.gmra.mrb[0].mxu0 %v341
    %v456 = vpop.f32.mrb[0].mxu0
    %v457 = vadd.f32 0.0, %v456
    %v458 = vpop.f32.mrb[0].mxu0
    %459 = vmatprep.mubr.f32.mxu0 0.0
    %460 = vmatmul.mubr.f32.gmra.mrb[0].mxu0 %v344
    %v461 = vpop.f32.mrb[0].mxu0
    %v462 = vadd.f32 0.0, %v461
    %v463 = vpop.f32.mrb[0].mxu0
    %464 = vmatprep.mubr.f32.mxu0 0.0
    %465 = vmatmul.mubr.f32.gmra.mrb[0].mxu0 %v347
    %v466 = vpop.f32.mrb[0].mxu0
    %v467 = vadd.f32 0.0, %v466
    %v468 = vpop.f32.mrb[0].mxu0
    %469 = vmatprep.mubr.f32.mxu0 0.0
    %470 = vmatmul.mubr.f32.gmra.mrb[0].mxu0 %v350
    %v471 = vpop.f32.mrb[0].mxu0
    %v472 = vadd.f32 0.0, %v471
    %v473 = vpop.f32.mrb[0].mxu0
    %474 = vmatprep.mubr.f32.mxu0 0.0
    %475 = vmatmul.mubr.f32.gmra.mrb[0].mxu0 %v353
    %v476 = vpop.f32.mrb[0].mxu0
    %v477 = vadd.f32 0.0, %v476
    %v478 = vpop.f32.mrb[0].mxu0
    %479 = vmatprep.mubr.f32.mxu0 0.0
    %480 = vmatmul.mubr.f32.gmra.mrb[0].mxu0 %v356
    %v481 = vpop.f32.mrb[0].mxu0
    %v482 = vadd.f32 0.0, %v481
    %v483 = vpop.f32.mrb[0].mxu0
    %484 = vmatprep.mubr.f32.mxu0 0.0
    %485 = vmatmul.mubr.f32.gmra.mrb[0].mxu0 %v359
    %v486 = vpop.f32.mrb[0].mxu0
    %v487 = vadd.f32 0.0, %v486
    %v488 = vpop.f32.mrb[0].mxu0
    %489 = vmatprep.mubr.f32.mxu0 0.0
    %490 = vmatmul.mubr.f32.gmra.mrb[0].mxu0 %v362
    %v491 = vpop.f32.mrb[0].mxu0
    %v492 = vadd.f32 0.0, %v491
    %v493 = vpop.f32.mrb[0].mxu0
    %494 = vmatprep.mubr.f32.mxu0 0.0
    %495 = vmatmul.mubr.f32.gmra.mrb[0].mxu0 %v365
    %v496 = vpop.f32.mrb[0].mxu0
    %v497 = vadd.f32 0.0, %v496
    %v498 = vpop.f32.mrb[0].mxu0
    %499 = vmatprep.mubr.f32.mxu0 0.0
    %500 = vmatmul.mubr.f32.gmra.mrb[0].mxu0 %v368
    %v501 = vpop.f32.mrb[0].mxu0
    %v502 = vadd.f32 0.0, %v501
    %v503 = vpop.f32.mrb[0].mxu0
    %504 = vmatprep.mubr.f32.mxu0 0.0
    %505 = vmatmul.mubr.f32.gmra.mrb[0].mxu0 %v371
    %v506 = vpop.f32.mrb[0].mxu0
    %v507 = vadd.f32 0.0, %v506
    %v508 = vpop.f32.mrb[0].mxu0
    %509 = vmatprep.mubr.f32.mxu0 0.0
    %510 = vmatmul.mubr.f32.gmra.mrb[0].mxu0 %v374
    %v511 = vpop.f32.mrb[0].mxu0
    %v512 = vadd.f32 0.0, %v511
    %v513 = vpop.f32.mrb[0].mxu0
    %514 = vmatprep.mubr.f32.mxu0 0.0
    %515 = vmatmul.mubr.f32.gmra.mrb[0].mxu0 %v377
    %v516 = vpop.f32.mrb[0].mxu0
    %v517 = vadd.f32 0.0, %v516
    %v518 = vpop.f32.mrb[0].mxu0
    %519 = vmatprep.mubr.f32.mxu0 0.0
    %520 = vmatmul.mubr.f32.gmra.mrb[0].mxu0 %v380
    %v521 = vpop.f32.mrb[0].mxu0
    %v522 = vadd.f32 0.0, %v521
    %v523 = vpop.f32.mrb[0].mxu0
    %524 = vmatprep.mubr.f32.mxu0 0.0
    %525 = vmatmul.mubr.f32.gmra.mrb[0].mxu0 %v383
    %v526 = vpop.f32.mrb[0].mxu0
    %v527 = vadd.f32 0.0, %v526
    %v528 = vpop.f32.mrb[0].mxu0
    %529 = vdwg.mxu0
    %546 = vrot.lane.b32.xlu0 %v452, 64
    %v547 = vpop.permute.xlu0 %546
    %548 = vrot.lane.b32.xlu0 %v457, 64
    %v549 = vpop.permute.xlu0 %548
    %550 = vrot.lane.b32.xlu0 %v462, 64
    %v551 = vpop.permute.xlu0 %550
    %552 = vrot.lane.b32.xlu0 %v467, 64
    %v553 = vpop.permute.xlu0 %552
    %554 = vrot.lane.b32.xlu0 %v472, 64
    %v555 = vpop.permute.xlu0 %554
    %556 = vrot.lane.b32.xlu0 %v477, 64
    %v557 = vpop.permute.xlu0 %556
    %558 = vrot.lane.b32.xlu0 %v482, 64
    %v559 = vpop.permute.xlu0 %558
    %560 = vrot.lane.b32.xlu0 %v487, 64
    %v561 = vpop.permute.xlu0 %560
    %562 = vrot.lane.b32.xlu0 %v492, 64
    %v563 = vpop.permute.xlu0 %562
    %564 = vrot.lane.b32.xlu0 %v497, 64
    %v565 = vpop.permute.xlu0 %564
    %566 = vrot.lane.b32.xlu0 %v502, 64
    %v567 = vpop.permute.xlu0 %566
    %568 = vrot.lane.b32.xlu0 %v507, 64
    %v569 = vpop.permute.xlu0 %568
    %570 = vrot.lane.b32.xlu0 %v512, 64
    %v571 = vpop.permute.xlu0 %570
    %572 = vrot.lane.b32.xlu0 %v517, 64
    %v573 = vpop.permute.xlu0 %572
    %574 = vrot.lane.b32.xlu0 %v522, 64
    %v575 = vpop.permute.xlu0 %574
    %576 = vrot.lane.b32.xlu0 %v527, 64
    %v577 = vpop.permute.xlu0 %576
    %v594 = vadd.f32 %v256, %v547
    %v595 = vadd.f32 %v261, %v549
    %v596 = vadd.f32 %v266, %v551
    %v597 = vadd.f32 %v271, %v553
    %v598 = vadd.f32 %v276, %v555
    %v599 = vadd.f32 %v281, %v557
    %v600 = vadd.f32 %v286, %v559
    %v601 = vadd.f32 %v291, %v561
    %v602 = vadd.f32 %v296, %v563
    %v603 = vadd.f32 %v301, %v565
    %v604 = vadd.f32 %v306, %v567
    %v605 = vadd.f32 %v311, %v569
    %v606 = vadd.f32 %v316, %v571
    %v607 = vadd.f32 %v321, %v573
    %v608 = vadd.f32 %v326, %v575
    %v609 = vadd.f32 %v331, %v577
    %v610 = vld [vmem:[#allocation10] sm:$0x1]
    %v612 = vlaneseq
    %v613 = vshrl.u32 %v612, 7
    %v614 = vsub.s32 0, %v613
    %v615 = vrot.slane %v610, %v614
    %616 = vrot.lane.b32.xlu0 %v615, 64
    %v617 = vpop.permute.xlu0 %616
    %v619 = vadd.f32 %v594, %v617
    %v620 = vadd.f32 %v595, %v617
    %v621 = vadd.f32 %v596, %v617
    %v622 = vadd.f32 %v597, %v617
    %v623 = vadd.f32 %v598, %v617
    %v624 = vadd.f32 %v599, %v617
    %v625 = vadd.f32 %v600, %v617
    %v626 = vadd.f32 %v601, %v617
    %v627 = vadd.f32 %v602, %v617
    %v628 = vadd.f32 %v603, %v617
    %v629 = vadd.f32 %v604, %v617
    %v630 = vadd.f32 %v605, %v617
    %v631 = vadd.f32 %v606, %v617
    %v632 = vadd.f32 %v607, %v617
    %v633 = vadd.f32 %v608, %v617
    %v634 = vadd.f32 %v609, %v617
    %635 = vrot.lane.b32.xlu0 %v120, 16
    %v636 = vpop.permute.xlu0 %635
    %637 = vrot.lane.b32.xlu0 %v121, 16
    %v638 = vpop.permute.xlu0 %637
    %639 = vrot.lane.b32.xlu0 %v122, 16
    %v640 = vpop.permute.xlu0 %639
    %641 = vrot.lane.b32.xlu0 %v123, 16
    %v642 = vpop.permute.xlu0 %641
    %643 = vrot.lane.b32.xlu0 %v124, 16
    %v644 = vpop.permute.xlu0 %643
    %645 = vrot.lane.b32.xlu0 %v125, 16
    %v646 = vpop.permute.xlu0 %645
    %647 = vrot.lane.b32.xlu0 %v126, 16
    %v648 = vpop.permute.xlu0 %647
    %649 = vrot.lane.b32.xlu0 %v127, 16
    %v650 = vpop.permute.xlu0 %649
    %651 = vrot.lane.b32.xlu0 %v128, 16
    %v652 = vpop.permute.xlu0 %651
    %653 = vrot.lane.b32.xlu0 %v129, 16
    %v654 = vpop.permute.xlu0 %653
    %655 = vrot.lane.b32.xlu0 %v130, 16
    %v656 = vpop.permute.xlu0 %655
    %657 = vrot.lane.b32.xlu0 %v131, 16
    %v658 = vpop.permute.xlu0 %657
    %659 = vrot.lane.b32.xlu0 %v132, 16
    %v660 = vpop.permute.xlu0 %659
    %661 = vrot.lane.b32.xlu0 %v133, 16
    %v662 = vpop.permute.xlu0 %661
    %663 = vrot.lane.b32.xlu0 %v134, 16
    %v664 = vpop.permute.xlu0 %663
    %665 = vrot.lane.b32.xlu0 %v135, 16
    %v666 = vpop.permute.xlu0 %665
    %683 = vrot.lane.b32.xlu0 %v120, 32
    %v684 = vpop.permute.xlu0 %683
    %685 = vrot.lane.b32.xlu0 %v121, 32
    %v686 = vpop.permute.xlu0 %685
    %687 = vrot.lane.b32.xlu0 %v122, 32
    %v688 = vpop.permute.xlu0 %687
    %689 = vrot.lane.b32.xlu0 %v123, 32
    %v690 = vpop.permute.xlu0 %689
    %691 = vrot.lane.b32.xlu0 %v124, 32
    %v692 = vpop.permute.xlu0 %691
    %693 = vrot.lane.b32.xlu0 %v125, 32
    %v694 = vpop.permute.xlu0 %693
    %695 = vrot.lane.b32.xlu0 %v126, 32
    %v696 = vpop.permute.xlu0 %695
    %697 = vrot.lane.b32.xlu0 %v127, 32
    %v698 = vpop.permute.xlu0 %697
    %699 = vrot.lane.b32.xlu0 %v128, 32
    %v700 = vpop.permute.xlu0 %699
    %701 = vrot.lane.b32.xlu0 %v129, 32
    %v702 = vpop.permute.xlu0 %701
    %703 = vrot.lane.b32.xlu0 %v130, 32
    %v704 = vpop.permute.xlu0 %703
    %705 = vrot.lane.b32.xlu0 %v131, 32
    %v706 = vpop.permute.xlu0 %705
    %707 = vrot.lane.b32.xlu0 %v132, 32
    %v708 = vpop.permute.xlu0 %707
    %709 = vrot.lane.b32.xlu0 %v133, 32
    %v710 = vpop.permute.xlu0 %709
    %711 = vrot.lane.b32.xlu0 %v134, 32
    %v712 = vpop.permute.xlu0 %711
    %713 = vrot.lane.b32.xlu0 %v135, 32
    %v714 = vpop.permute.xlu0 %713
    %731 = vrot.lane.b32.xlu0 %v120, 48
    %v732 = vpop.permute.xlu0 %731
    %733 = vrot.lane.b32.xlu0 %v121, 48
    %v734 = vpop.permute.xlu0 %733
    %735 = vrot.lane.b32.xlu0 %v122, 48
    %v736 = vpop.permute.xlu0 %735
    %737 = vrot.lane.b32.xlu0 %v123, 48
    %v738 = vpop.permute.xlu0 %737
    %739 = vrot.lane.b32.xlu0 %v124, 48
    %v740 = vpop.permute.xlu0 %739
    %741 = vrot.lane.b32.xlu0 %v125, 48
    %v742 = vpop.permute.xlu0 %741
    %743 = vrot.lane.b32.xlu0 %v126, 48
    %v744 = vpop.permute.xlu0 %743
    %745 = vrot.lane.b32.xlu0 %v127, 48
    %v746 = vpop.permute.xlu0 %745
    %747 = vrot.lane.b32.xlu0 %v128, 48
    %v748 = vpop.permute.xlu0 %747
    %749 = vrot.lane.b32.xlu0 %v129, 48
    %v750 = vpop.permute.xlu0 %749
    %751 = vrot.lane.b32.xlu0 %v130, 48
    %v752 = vpop.permute.xlu0 %751
    %753 = vrot.lane.b32.xlu0 %v131, 48
    %v754 = vpop.permute.xlu0 %753
    %755 = vrot.lane.b32.xlu0 %v132, 48
    %v756 = vpop.permute.xlu0 %755
    %757 = vrot.lane.b32.xlu0 %v133, 48
    %v758 = vpop.permute.xlu0 %757
    %759 = vrot.lane.b32.xlu0 %v134, 48
    %v760 = vpop.permute.xlu0 %759
    %761 = vrot.lane.b32.xlu0 %v135, 48
    %v762 = vpop.permute.xlu0 %761
    %v779 = vsel %vm336, %v120, %v636
    %v780 = vsel %vm336, %v121, %v638
    %v781 = vsel %vm336, %v122, %v640
    %v782 = vsel %vm336, %v123, %v642
    %v783 = vsel %vm336, %v124, %v644
    %v784 = vsel %vm336, %v125, %v646
    %v785 = vsel %vm336, %v126, %v648
    %v786 = vsel %vm336, %v127, %v650
    %v787 = vsel %vm336, %v128, %v652
    %v788 = vsel %vm336, %v129, %v654
    %v789 = vsel %vm336, %v130, %v656
    %v790 = vsel %vm336, %v131, %v658
    %v791 = vsel %vm336, %v132, %v660
    %v792 = vsel %vm336, %v133, %v662
    %v793 = vsel %vm336, %v134, %v664
    %v794 = vsel %vm336, %v135, %v666
    %v795 = vsel %vm140, %v779, %v684
    %v796 = vsel %vm140, %v780, %v686
    %v797 = vsel %vm140, %v781, %v688
    %v798 = vsel %vm140, %v782, %v690
    %v799 = vsel %vm140, %v783, %v692
    %v800 = vsel %vm140, %v784, %v694
    %v801 = vsel %vm140, %v785, %v696
    %v802 = vsel %vm140, %v786, %v698
    %v803 = vsel %vm140, %v787, %v700
    %v804 = vsel %vm140, %v788, %v702
    %v805 = vsel %vm140, %v789, %v704
    %v806 = vsel %vm140, %v790, %v706
    %v807 = vsel %vm140, %v791, %v708
    %v808 = vsel %vm140, %v792, %v710
    %v809 = vsel %vm140, %v793, %v712
    %v810 = vsel %vm140, %v794, %v714
    %vm811 = vcmask 392192
    %v812 = vsel %vm811, %v795, %v732
    %v813 = vsel %vm811, %v796, %v734
    %v814 = vsel %vm811, %v797, %v736
    %v815 = vsel %vm811, %v798, %v738
    %v816 = vsel %vm811, %v799, %v740
    %v817 = vsel %vm811, %v800, %v742
    %v818 = vsel %vm811, %v801, %v744
    %v819 = vsel %vm811, %v802, %v746
    %v820 = vsel %vm811, %v803, %v748
    %v821 = vsel %vm811, %v804, %v750
    %v822 = vsel %vm811, %v805, %v752
    %v823 = vsel %vm811, %v806, %v754
    %v824 = vsel %vm811, %v807, %v756
    %v825 = vsel %vm811, %v808, %v758
    %v826 = vsel %vm811, %v809, %v760
    %v827 = vsel %vm811, %v810, %v762
    %v828 = vmul.f32 %v256, %v812
    %v829 = vmul.f32 %v261, %v813
    %v830 = vmul.f32 %v266, %v814
    %v831 = vmul.f32 %v271, %v815
    %v832 = vmul.f32 %v276, %v816
    %v833 = vmul.f32 %v281, %v817
    %v834 = vmul.f32 %v286, %v818
    %v835 = vmul.f32 %v291, %v819
    %v836 = vmul.f32 %v296, %v820
    %v837 = vmul.f32 %v301, %v821
    %v838 = vmul.f32 %v306, %v822
    %v839 = vmul.f32 %v311, %v823
    %v840 = vmul.f32 %v316, %v824
    %v841 = vmul.f32 %v321, %v825
    %v842 = vmul.f32 %v326, %v826
    %v843 = vmul.f32 %v331, %v827
    %v844 = vld [vmem:[#allocation11] sm:$0xff]
    %v845 = vld [vmem:[#allocation11 + $0x8] sm:$0xff]
    %v846 = vld [vmem:[#allocation11 + $0x10] sm:$0xff]
    %v847 = vld [vmem:[#allocation11 + $0x18] sm:$0xff]
    %v848 = vld [vmem:[#allocation11 + $0x20] sm:$0xff]
    %v849 = vld [vmem:[#allocation11 + $0x28] sm:$0xff]
    %v850 = vld [vmem:[#allocation11 + $0x30] sm:$0xff]
    %v851 = vld [vmem:[#allocation11 + $0x38] sm:$0xff]
    %vm852 = vcmask 523264
    %v854 = vsel %vm852, %v828, 0
    %v857 = vsel %vm852, %v829, 0
    %v860 = vsel %vm852, %v830, 0
    %v863 = vsel %vm852, %v831, 0
    %v866 = vsel %vm852, %v832, 0
    %v869 = vsel %vm852, %v833, 0
    %v872 = vsel %vm852, %v834, 0
    %v875 = vsel %vm852, %v835, 0
    %v878 = vsel %vm852, %v836, 0
    %v881 = vsel %vm852, %v837, 0
    %v884 = vsel %vm852, %v838, 0
    %v887 = vsel %vm852, %v839, 0
    %v890 = vsel %vm852, %v840, 0
    %v893 = vsel %vm852, %v841, 0
    %v896 = vsel %vm852, %v842, 0
    %v899 = vsel %vm852, %v843, 0
    %901 = vmatprep.subr.mxu0 0.0
    %902 = vmatpush1.msra.mxu0 %v844
    %903 = vmatprep.subr.mxu0 0.0
    %904 = vmatpush1.msra.mxu0 %v845
    %905 = vmatprep.subr.mxu0 0.0
    %906 = vmatpush1.msra.mxu0 %v846
    %907 = vmatprep.subr.mxu0 0.0
    %908 = vmatpush1.msra.mxu0 %v847
    %909 = vmatprep.subr.mxu0 0.0
    %910 = vmatpush1.msra.mxu0 %v848
    %911 = vmatprep.subr.mxu0 0.0
    %912 = vmatpush1.msra.mxu0 %v849
    %913 = vmatprep.subr.mxu0 0.0
    %914 = vmatpush1.msra.mxu0 %v850
    %915 = vmatprep.subr.mxu0 0.0
    %916 = vmatpush1.msra.mxu0 %v851
    %917 = vmatprep.subr.mxu0 0.0
    %918 = vmatpush1.msra.mxu0 0.0
    %919 = vmatprep.subr.mxu0 0.0
    %920 = vmatpush1.msra.mxu0 0.0
    %921 = vmatprep.subr.mxu0 0.0
    %922 = vmatpush1.msra.mxu0 0.0
    %923 = vmatprep.subr.mxu0 0.0
    %924 = vmatpush1.msra.mxu0 0.0
    %925 = vmatprep.subr.mxu0 0.0
    %926 = vmatpush1.msra.mxu0 0.0
    %927 = vmatprep.subr.mxu0 0.0
    %928 = vmatpush1.msra.mxu0 0.0
    %929 = vmatprep.subr.mxu0 0.0
    %930 = vmatpush1.msra.mxu0 0.0
    %931 = vmatprep.subr.mxu0 0.0
    %932 = vmatpush1.msra.mxu0 0.0
    %933 = vmatprep.subr.mxu0 0.0
    %934 = vmatpush1.msra.mxu0 0.0
    %935 = vmatprep.subr.mxu0 0.0
    %936 = vmatpush1.msra.mxu0 0.0
    %937 = vmatprep.subr.mxu0 0.0
    %938 = vmatpush1.msra.mxu0 0.0
    %939 = vmatprep.subr.mxu0 0.0
    %940 = vmatpush1.msra.mxu0 0.0
    %941 = vmatprep.subr.mxu0 0.0
    %942 = vmatpush1.msra.mxu0 0.0
    %943 = vmatprep.subr.mxu0 0.0
    %944 = vmatpush1.msra.mxu0 0.0
    %945 = vmatprep.subr.mxu0 0.0
    %946 = vmatpush1.msra.mxu0 0.0
    %947 = vmatprep.subr.mxu0 0.0
    %948 = vmatpush1.msra.mxu0 0.0
    %949 = vmatprep.subr.mxu0 0.0
    %950 = vmatpush1.msra.mxu0 0.0
    %951 = vmatprep.subr.mxu0 0.0
    %952 = vmatpush1.msra.mxu0 0.0
    %953 = vmatprep.subr.mxu0 0.0
    %954 = vmatpush1.msra.mxu0 0.0
    %955 = vmatprep.subr.mxu0 0.0
    %956 = vmatpush1.msra.mxu0 0.0
    %957 = vmatprep.subr.mxu0 0.0
    %958 = vmatpush1.msra.mxu0 0.0
    %959 = vmatprep.subr.mxu0 0.0
    %960 = vmatpush1.msra.mxu0 0.0
    %961 = vmatprep.subr.mxu0 0.0
    %962 = vmatpush1.msra.mxu0 0.0
    %963 = vmatprep.subr.mxu0 0.0
    %964 = vmatpush1.msra.mxu0 0.0
    %965 = vmatprep.mubr.f32.mxu0 0.0
    %966 = vmatmul.mubr.f32.gmra.mrb[0].mxu0 %v854
    %v967 = vpop.f32.mrb[0].mxu0
    %v968 = vadd.f32 0.0, %v967
    %v969 = vpop.f32.mrb[0].mxu0
    %970 = vmatprep.mubr.f32.mxu0 0.0
    %971 = vmatmul.mubr.f32.gmra.mrb[0].mxu0 %v857
    %v972 = vpop.f32.mrb[0].mxu0
    %v973 = vadd.f32 0.0, %v972
    %v974 = vpop.f32.mrb[0].mxu0
    %975 = vmatprep.mubr.f32.mxu0 0.0
    %976 = vmatmul.mubr.f32.gmra.mrb[0].mxu0 %v860
    %v977 = vpop.f32.mrb[0].mxu0
    %v978 = vadd.f32 0.0, %v977
    %v979 = vpop.f32.mrb[0].mxu0
    %980 = vmatprep.mubr.f32.mxu0 0.0
    %981 = vmatmul.mubr.f32.gmra.mrb[0].mxu0 %v863
    %v982 = vpop.f32.mrb[0].mxu0
    %v983 = vadd.f32 0.0, %v982
    %v984 = vpop.f32.mrb[0].mxu0
    %985 = vmatprep.mubr.f32.mxu0 0.0
    %986 = vmatmul.mubr.f32.gmra.mrb[0].mxu0 %v866
    %v987 = vpop.f32.mrb[0].mxu0
    %v988 = vadd.f32 0.0, %v987
    %v989 = vpop.f32.mrb[0].mxu0
    %990 = vmatprep.mubr.f32.mxu0 0.0
    %991 = vmatmul.mubr.f32.gmra.mrb[0].mxu0 %v869
    %v992 = vpop.f32.mrb[0].mxu0
    %v993 = vadd.f32 0.0, %v992
    %v994 = vpop.f32.mrb[0].mxu0
    %995 = vmatprep.mubr.f32.mxu0 0.0
    %996 = vmatmul.mubr.f32.gmra.mrb[0].mxu0 %v872
    %v997 = vpop.f32.mrb[0].mxu0
    %v998 = vadd.f32 0.0, %v997
    %v999 = vpop.f32.mrb[0].mxu0
    %1000 = vmatprep.mubr.f32.mxu0 0.0
    %1001 = vmatmul.mubr.f32.gmra.mrb[0].mxu0 %v875
    %v1002 = vpop.f32.mrb[0].mxu0
    %v1003 = vadd.f32 0.0, %v1002
    %v1004 = vpop.f32.mrb[0].mxu0
    %1005 = vmatprep.mubr.f32.mxu0 0.0
    %1006 = vmatmul.mubr.f32.gmra.mrb[0].mxu0 %v878
    %v1007 = vpop.f32.mrb[0].mxu0
    %v1008 = vadd.f32 0.0, %v1007
    %v1009 = vpop.f32.mrb[0].mxu0
    %1010 = vmatprep.mubr.f32.mxu0 0.0
    %1011 = vmatmul.mubr.f32.gmra.mrb[0].mxu0 %v881
    %v1012 = vpop.f32.mrb[0].mxu0
    %v1013 = vadd.f32 0.0, %v1012
    %v1014 = vpop.f32.mrb[0].mxu0
    %1015 = vmatprep.mubr.f32.mxu0 0.0
    %1016 = vmatmul.mubr.f32.gmra.mrb[0].mxu0 %v884
    %v1017 = vpop.f32.mrb[0].mxu0
    %v1018 = vadd.f32 0.0, %v1017
    %v1019 = vpop.f32.mrb[0].mxu0
    %1020 = vmatprep.mubr.f32.mxu0 0.0
    %1021 = vmatmul.mubr.f32.gmra.mrb[0].mxu0 %v887
    %v1022 = vpop.f32.mrb[0].mxu0
    %v1023 = vadd.f32 0.0, %v1022
    %v1024 = vpop.f32.mrb[0].mxu0
    %1025 = vmatprep.mubr.f32.mxu0 0.0
    %1026 = vmatmul.mubr.f32.gmra.mrb[0].mxu0 %v890
    %v1027 = vpop.f32.mrb[0].mxu0
    %v1028 = vadd.f32 0.0, %v1027
    %v1029 = vpop.f32.mrb[0].mxu0
    %1030 = vmatprep.mubr.f32.mxu0 0.0
    %1031 = vmatmul.mubr.f32.gmra.mrb[0].mxu0 %v893
    %v1032 = vpop.f32.mrb[0].mxu0
    %v1033 = vadd.f32 0.0, %v1032
    %v1034 = vpop.f32.mrb[0].mxu0
    %1035 = vmatprep.mubr.f32.mxu0 0.0
    %1036 = vmatmul.mubr.f32.gmra.mrb[0].mxu0 %v896
    %v1037 = vpop.f32.mrb[0].mxu0
    %v1038 = vadd.f32 0.0, %v1037
    %v1039 = vpop.f32.mrb[0].mxu0
    %1040 = vmatprep.mubr.f32.mxu0 0.0
    %1041 = vmatmul.mubr.f32.gmra.mrb[0].mxu0 %v899
    %v1042 = vpop.f32.mrb[0].mxu0
    %v1043 = vadd.f32 0.0, %v1042
    %v1044 = vpop.f32.mrb[0].mxu0
    %1045 = vdwg.mxu0
    %1062 = vrot.lane.b32.xlu0 %v968, 64
    %v1063 = vpop.permute.xlu0 %1062
    %1064 = vrot.lane.b32.xlu0 %v973, 64
    %v1065 = vpop.permute.xlu0 %1064
    %1066 = vrot.lane.b32.xlu0 %v978, 64
    %v1067 = vpop.permute.xlu0 %1066
    %1068 = vrot.lane.b32.xlu0 %v983, 64
    %v1069 = vpop.permute.xlu0 %1068
    %1070 = vrot.lane.b32.xlu0 %v988, 64
    %v1071 = vpop.permute.xlu0 %1070
    %1072 = vrot.lane.b32.xlu0 %v993, 64
    %v1073 = vpop.permute.xlu0 %1072
    %1074 = vrot.lane.b32.xlu0 %v998, 64
    %v1075 = vpop.permute.xlu0 %1074
    %1076 = vrot.lane.b32.xlu0 %v1003, 64
    %v1077 = vpop.permute.xlu0 %1076
    %1078 = vrot.lane.b32.xlu0 %v1008, 64
    %v1079 = vpop.permute.xlu0 %1078
    %1080 = vrot.lane.b32.xlu0 %v1013, 64
    %v1081 = vpop.permute.xlu0 %1080
    %1082 = vrot.lane.b32.xlu0 %v1018, 64
    %v1083 = vpop.permute.xlu0 %1082
    %1084 = vrot.lane.b32.xlu0 %v1023, 64
    %v1085 = vpop.permute.xlu0 %1084
    %1086 = vrot.lane.b32.xlu0 %v1028, 64
    %v1087 = vpop.permute.xlu0 %1086
    %1088 = vrot.lane.b32.xlu0 %v1033, 64
    %v1089 = vpop.permute.xlu0 %1088
    %1090 = vrot.lane.b32.xlu0 %v1038, 64
    %v1091 = vpop.permute.xlu0 %1090
    %1092 = vrot.lane.b32.xlu0 %v1043, 64
    %v1093 = vpop.permute.xlu0 %1092
    %v1110 = vadd.f32 %v619, %v1063
    %v1111 = vadd.f32 %v620, %v1065
    %v1112 = vadd.f32 %v621, %v1067
    %v1113 = vadd.f32 %v622, %v1069
    %v1114 = vadd.f32 %v623, %v1071
    %v1115 = vadd.f32 %v624, %v1073
    %v1116 = vadd.f32 %v625, %v1075
    %v1117 = vadd.f32 %v626, %v1077
    %v1118 = vadd.f32 %v627, %v1079
    %v1119 = vadd.f32 %v628, %v1081
    %v1120 = vadd.f32 %v629, %v1083
    %v1121 = vadd.f32 %v630, %v1085
    %v1122 = vadd.f32 %v631, %v1087
    %v1123 = vadd.f32 %v632, %v1089
    %v1124 = vadd.f32 %v633, %v1091
    %v1125 = vadd.f32 %v634, %v1093
    %1142 = vrot.lane.b32.xlu0 %v1110, 64
    %v1143 = vpop.permute.xlu0 %1142
    %1144 = vrot.lane.b32.xlu0 %v1111, 64
    %v1145 = vpop.permute.xlu0 %1144
    %1146 = vrot.lane.b32.xlu0 %v1112, 64
    %v1147 = vpop.permute.xlu0 %1146
    %1148 = vrot.lane.b32.xlu0 %v1113, 64
    %v1149 = vpop.permute.xlu0 %1148
    %1150 = vrot.lane.b32.xlu0 %v1114, 64
    %v1151 = vpop.permute.xlu0 %1150
    %1152 = vrot.lane.b32.xlu0 %v1115, 64
    %v1153 = vpop.permute.xlu0 %1152
    %1154 = vrot.lane.b32.xlu0 %v1116, 64
    %v1155 = vpop.permute.xlu0 %1154
    %1156 = vrot.lane.b32.xlu0 %v1117, 64
    %v1157 = vpop.permute.xlu0 %1156
    %1158 = vrot.lane.b32.xlu0 %v1118, 64
    %v1159 = vpop.permute.xlu0 %1158
    %1160 = vrot.lane.b32.xlu0 %v1119, 64
    %v1161 = vpop.permute.xlu0 %1160
    %1162 = vrot.lane.b32.xlu0 %v1120, 64
    %v1163 = vpop.permute.xlu0 %1162
    %1164 = vrot.lane.b32.xlu0 %v1121, 64
    %v1165 = vpop.permute.xlu0 %1164
    %1166 = vrot.lane.b32.xlu0 %v1122, 64
    %v1167 = vpop.permute.xlu0 %1166
    %1168 = vrot.lane.b32.xlu0 %v1123, 64
    %v1169 = vpop.permute.xlu0 %1168
    %1170 = vrot.lane.b32.xlu0 %v1124, 64
    %v1171 = vpop.permute.xlu0 %1170
    %1172 = vrot.lane.b32.xlu0 %v1125, 64
    %v1173 = vpop.permute.xlu0 %1172
    %vm1190 = vcmask 31744
    %v1191 = vsel %vm1190, %v1143, 0.0
    %v1192 = vsel %vm1190, %v1145, 0.0
    %v1193 = vsel %vm1190, %v1147, 0.0
    %v1194 = vsel %vm1190, %v1149, 0.0
    %v1195 = vsel %vm1190, %v1151, 0.0
    %v1196 = vsel %vm1190, %v1153, 0.0
    %v1197 = vsel %vm1190, %v1155, 0.0
    %v1198 = vsel %vm1190, %v1157, 0.0
    %v1199 = vsel %vm1190, %v1159, 0.0
    %v1200 = vsel %vm1190, %v1161, 0.0
    %v1201 = vsel %vm1190, %v1163, 0.0
    %v1202 = vsel %vm1190, %v1165, 0.0
    %v1203 = vsel %vm1190, %v1167, 0.0
    %v1204 = vsel %vm1190, %v1169, 0.0
    %v1205 = vsel %vm1190, %v1171, 0.0
    %v1206 = vsel %vm1190, %v1173, 0.0
    %1207 = vxpose.xlu0.b32.start [1/16] %v1191, 128
    %1208 = vxpose.xlu0.b32.cont [2/16] %v1192, 128
    %1209 = vxpose.xlu0.b32.cont [3/16] %v1193, 128
    %1210 = vxpose.xlu0.b32.cont [4/16] %v1194, 128
    %1211 = vxpose.xlu0.b32.cont [5/16] %v1195, 128
    %1212 = vxpose.xlu0.b32.cont [6/16] %v1196, 128
    %1213 = vxpose.xlu0.b32.cont [7/16] %v1197, 128
    %1214 = vxpose.xlu0.b32.cont [8/16] %v1198, 128
    %1215 = vxpose.xlu0.b32.cont [9/16] %v1199, 128
    %1216 = vxpose.xlu0.b32.cont [10/16] %v1200, 128
    %1217 = vxpose.xlu0.b32.cont [11/16] %v1201, 128
    %1218 = vxpose.xlu0.b32.cont [12/16] %v1202, 128
    %1219 = vxpose.xlu0.b32.cont [13/16] %v1203, 128
    %1220 = vxpose.xlu0.b32.cont [14/16] %v1204, 128
    %1221 = vxpose.xlu0.b32.cont [15/16] %v1205, 128
    %1222 = vxpose.xlu0.b32.end [16/16] %v1206, 128
    %v1223 = vpop.trf.xlu0
    %v1224 = vpop.trf.xlu0
    %v1225 = vpop.trf.xlu0
    %v1226 = vpop.trf.xlu0
    %v1227 = vpop.trf.xlu0
    %v1228 = vpop.trf.xlu0
    %v1229 = vpop.trf.xlu0
    %v1230 = vpop.trf.xlu0
    %v1231 = vpop.trf.xlu0
    %v1232 = vpop.trf.xlu0
    %v1233 = vpop.trf.xlu0
    %v1234 = vpop.trf.xlu0
    %v1235 = vpop.trf.xlu0
    %v1236 = vpop.trf.xlu0
    %v1237 = vpop.trf.xlu0
    %v1238 = vpop.trf.xlu0
    %1239 = vst [vmem:[#allocation13] sm:$0xf] %v1223
    // Predicated region
    $region50: #{tpu_custom_call.1} parent=1 // pred_check
      _
    $region51: #{tpu_custom_call.1} parent=1 // pred_check_branch
      %1241 = sbr.rel (0) target = $region53
    $region52: #{tpu_custom_call.1} parent=1 // pred_region
      %s1243 = ssub.s32 64, 64
      %1244 = vsyncadd [#allocation4], %s1243
      %s1246 = sshll.u32 [#allocation13], 4
      %s1247 = int_to_ptr.vmem [resolvable:$true] %s1246
      %1249 = dma.vmem_to_hbm [thread:$0]  %s1247, 64, %s6, [#allocation4]
    $region53: #{tpu_custom_call.1} parent=1 // pred_fallthru
      _
    // Predicated region
    $region54: #{tpu_custom_call.1} parent=1 // pred_check
      _
    $region55: #{tpu_custom_call.1} parent=1 // pred_check_branch
      %1251 = sbr.rel (0) target = $region57
    $region56: #{tpu_custom_call.1} parent=1 // pred_region
      %1252 = dma.done [#allocation4], 64
    $region57: #{tpu_custom_call.1} parent=1 // pred_fallthru
      _
    %1253 = vsyncpa [#allocation3], 1
    %1254 = vsyncpa [#allocation6], 1
    %1255 = vsyncpa [#allocation9], 1
    %1256 = vsyncpa [#allocation12], 1
    %1257 = vsyncpa [#allocation4], 1

// kernel: tpu_custom_call.1
$region0: #{tpu_custom_call.1}
  #allocation0 [shape = 'u32[]', space=smem, size = 0x4, offset = 0x4, fixed_abs, tag = 'smem constant byte address 0x4 - core index']
  #allocation1 [shape = 'u32[144,128]{1,0:T(1,128)}', space=vmem, size = 0x12000, scoped, tag = 'internal scratch']
  %s0 = inlined_call_operand.hbm [shape: f32[16,32], index: 0, kind: input, shape index: {}]
  %s1 = inlined_call_operand.hbm [shape: f32[16,16], index: 1, kind: input, shape index: {}]
  %s2 = inlined_call_operand.hbm [shape: f32[32,68], index: 2, kind: input, shape index: {}]
  %s3 = inlined_call_operand.hbm [shape: f32[16,4], index: 3, kind: input, shape index: {}]
  %s4 = inlined_call_operand.hbm [shape: f32[1,4], index: 4, kind: input, shape index: {}]
  %s5 = inlined_call_operand.hbm [shape: f32[64,4], index: 5, kind: input, shape index: {}]
  %s6 = inlined_call_operand.hbm [shape: f32[4,16], index: 6, kind: output, shape index: {}]
  %s7 = sld [smem:[#allocation0]]
  $region58: #{tpu_custom_call.1} parent=0
    _
  %s9 = ssub.s32 1, %s7
  %s10 = scalar_select 0, %s9, %s7
  $region1: #{tpu_custom_call.1} parent=0
    #allocation2 [shape = 'u8[65536]{0}', space=vmem, size = 0x10000, scoped, tag = 'input window, operand 0, single buffered']
    #allocation3 [shape = 's32[1]{0}', space=sflag, size = 0x4, scoped, tag = 'scoped memory for tpu_custom_call.1']
    #allocation4 [shape = 's32[1]{0}', space=sflag, size = 0x4, scoped, tag = 'scoped memory for tpu_custom_call.1']
    #allocation5 [shape = 'u8[65536]{0}', space=vmem, size = 0x10000, scoped, tag = 'input window, operand 1, single buffered']
    #allocation6 [shape = 's32[1]{0}', space=sflag, size = 0x4, scoped, tag = 'scoped memory for tpu_custom_call.1']
    #allocation7 [shape = 'u8[16384]{0}', space=vmem, size = 0x4000, scoped, tag = 'input window, operand 2, single buffered']
    #allocation8 [shape = 'u8[8192]{0}', space=vmem, size = 0x2000, scoped, tag = 'input window, operand 3, single buffered']
    #allocation9 [shape = 's32[1]{0}', space=sflag, size = 0x4, scoped, tag = 'scoped memory for tpu_custom_call.1']
    #allocation10 [shape = 'u8[512]{0}', space=vmem, size = 0x400, scoped, tag = 'input window, operand 4, single buffered']
    #allocation11 [shape = 'u8[32768]{0}', space=vmem, size = 0x8000, scoped, tag = 'input window, operand 5, single buffered']
    #allocation12 [shape = 's32[1]{0}', space=sflag, size = 0x4, scoped, tag = 'scoped memory for tpu_custom_call.1']
    #allocation13 [shape = 'u8[2048]{0}', space=vmem, size = 0x800, scoped, tag = 'output window, operand 0, single buffered']
    %11 = vsyncpa [#allocation3], 0
    %12 = vsyncpa [#allocation6], 0
    %13 = vsyncpa [#allocation9], 0
    %14 = vsyncpa [#allocation12], 0
    %15 = vsyncpa [#allocation4], 0
    // Predicated region
    $region2: #{tpu_custom_call.1} parent=1 // pred_check
      _
    $region3: #{tpu_custom_call.1} parent=1 // pred_check_branch
      %17 = sbr.rel (0) target = $region5
    $region4: #{tpu_custom_call.1} parent=1 // pred_region
      %s19 = ssub.s32 2048, 256
      %20 = vsyncadd [#allocation3], %s19
      %s21 = sshll.u32 [#allocation2], 4
      %s22 = int_to_ptr.vmem [resolvable:$true] %s21
      %27 = dma.hbm_to_vmem [thread:$0]  %s0, 256, %s22, [#allocation3], 128, 128, 8
    $region5: #{tpu_custom_call.1} parent=1 // pred_fallthru
      _
    // Predicated region
    $region6: #{tpu_custom_call.1} parent=1 // pred_check
      _
    $region7: #{tpu_custom_call.1} parent=1 // pred_check_branch
      %29 = sbr.rel (0) target = $region9
    $region8: #{tpu_custom_call.1} parent=1 // pred_region
      %s31 = ssub.s32 2048, 256
      %32 = vsyncadd [#allocation6], %s31
      %s33 = sshll.u32 [#allocation5], 4
      %s34 = int_to_ptr.vmem [resolvable:$true] %s33
      %39 = dma.hbm_to_vmem [thread:$0]  %s1, 256, %s34, [#allocation6], 128, 128, 8
    $region9: #{tpu_custom_call.1} parent=1 // pred_fallthru
      _
    // Predicated region
    $region10: #{tpu_custom_call.1} parent=1 // pred_check
      _
    $region11: #{tpu_custom_call.1} parent=1 // pred_check_branch
      %41 = sbr.rel (0) target = $region13
    $region12: #{tpu_custom_call.1} parent=1 // pred_region
      %s43 = ssub.s32 512, 512
      %44 = vsyncadd [#allocation6], %s43
      %s45 = sshll.u32 [#allocation7], 4
      %s46 = int_to_ptr.vmem [resolvable:$true] %s45
      %51 = dma.hbm_to_vmem [thread:$0]  %s2, 512, %s46, [#allocation6], 128, 128, 8
    $region13: #{tpu_custom_call.1} parent=1 // pred_fallthru
      _
    // Predicated region
    $region14: #{tpu_custom_call.1} parent=1 // pred_check
      _
    $region15: #{tpu_custom_call.1} parent=1 // pred_check_branch
      %53 = sbr.rel (0) target = $region17
    $region16: #{tpu_custom_call.1} parent=1 // pred_region
      %s55 = ssub.s32 256, 256
      %56 = vsyncadd [#allocation9], %s55
      %s57 = sshll.u32 [#allocation8], 4
      %s58 = int_to_ptr.vmem [resolvable:$true] %s57
      %63 = dma.hbm_to_vmem [thread:$0]  %s3, 256, %s58, [#allocation9], 128, 128, 8
    $region17: #{tpu_custom_call.1} parent=1 // pred_fallthru
      _
    // Predicated region
    $region18: #{tpu_custom_call.1} parent=1 // pred_check
      _
    $region19: #{tpu_custom_call.1} parent=1 // pred_check_branch
      %65 = sbr.rel (0) target = $region21
    $region20: #{tpu_custom_call.1} parent=1 // pred_region
      %s67 = ssub.s32 16, 16
      %68 = vsyncadd [#allocation9], %s67
      %s70 = sshll.u32 [#allocation10], 4
      %s71 = int_to_ptr.vmem [resolvable:$true] %s70
      %73 = dma.hbm_to_vmem [thread:$0]  %s4, 16, %s71, [#allocation9]
    $region21: #{tpu_custom_call.1} parent=1 // pred_fallthru
      _
    // Predicated region
    $region22: #{tpu_custom_call.1} parent=1 // pred_check
      _
    $region23: #{tpu_custom_call.1} parent=1 // pred_check_branch
      %75 = sbr.rel (0) target = $region25
    $region24: #{tpu_custom_call.1} parent=1 // pred_region
      %s77 = ssub.s32 1024, 1024
      %78 = vsyncadd [#allocation12], %s77
      %s79 = sshll.u32 [#allocation11], 4
      %s80 = int_to_ptr.vmem [resolvable:$true] %s79
      %85 = dma.hbm_to_vmem [thread:$0]  %s5, 1024, %s80, [#allocation12], 128, 128, 8
    $region25: #{tpu_custom_call.1} parent=1 // pred_fallthru
      _
    // Predicated region
    $region26: #{tpu_custom_call.1} parent=1 // pred_check
      _
    $region27: #{tpu_custom_call.1} parent=1 // pred_check_branch
      %87 = sbr.rel (0) target = $region29
    $region28: #{tpu_custom_call.1} parent=1 // pred_region
      %88 = dma.done [#allocation3], 2048
    $region29: #{tpu_custom_call.1} parent=1 // pred_fallthru
      _
    // Predicated region
    $region30: #{tpu_custom_call.1} parent=1 // pred_check
      _
    $region31: #{tpu_custom_call.1} parent=1 // pred_check_branch
      %90 = sbr.rel (0) target = $region33
    $region32: #{tpu_custom_call.1} parent=1 // pred_region
      %91 = dma.done [#allocation6], 2048
    $region33: #{tpu_custom_call.1} parent=1 // pred_fallthru
      _
    // Predicated region
    $region34: #{tpu_custom_call.1} parent=1 // pred_check
      _
    $region35: #{tpu_custom_call.1} parent=1 // pred_check_branch
      %93 = sbr.rel (0) target = $region37
    $region36: #{tpu_custom_call.1} parent=1 // pred_region
      %94 = dma.done [#allocation6], 512
    $region37: #{tpu_custom_call.1} parent=1 // pred_fallthru
      _
    // Predicated region
    $region38: #{tpu_custom_call.1} parent=1 // pred_check
      _
    $region39: #{tpu_custom_call.1} parent=1 // pred_check_branch
      %96 = sbr.rel (0) target = $region41
    $region40: #{tpu_custom_call.1} parent=1 // pred_region
      %97 = dma.done [#allocation9], 256
    $region41: #{tpu_custom_call.1} parent=1 // pred_fallthru
      _
    // Predicated region
    $region42: #{tpu_custom_call.1} parent=1 // pred_check
      _
    $region43: #{tpu_custom_call.1} parent=1 // pred_check_branch
      %99 = sbr.rel (0) target = $region45
    $region44: #{tpu_custom_call.1} parent=1 // pred_region
      %100 = dma.done [#allocation9], 16
    $region45: #{tpu_custom_call.1} parent=1 // pred_fallthru
      _
    // Predicated region
    $region46: #{tpu_custom_call.1} parent=1 // pred_check
      _
    $region47: #{tpu_custom_call.1} parent=1 // pred_check_branch
      %102 = sbr.rel (0) target = $region49
    $region48: #{tpu_custom_call.1} parent=1 // pred_region
      %103 = dma.done [#allocation12], 1024
    $region49: #{tpu_custom_call.1} parent=1 // pred_fallthru
      _
    %v104 = vld [vmem:[#allocation2] sm:$0xff]
    %v105 = vld [vmem:[#allocation2 + $0x8] sm:$0xff]
    %v106 = vld [vmem:[#allocation2 + $0x10] sm:$0xff]
    %v107 = vld [vmem:[#allocation2 + $0x18] sm:$0xff]
    %v108 = vld [vmem:[#allocation2 + $0x20] sm:$0xff]
    %v109 = vld [vmem:[#allocation2 + $0x28] sm:$0xff]
    %v110 = vld [vmem:[#allocation2 + $0x30] sm:$0xff]
    %v111 = vld [vmem:[#allocation2 + $0x38] sm:$0xff]
    %v112 = vld [vmem:[#allocation2 + $0x40] sm:$0xff]
    %v113 = vld [vmem:[#allocation2 + $0x48] sm:$0xff]
    %v114 = vld [vmem:[#allocation2 + $0x50] sm:$0xff]
    %v115 = vld [vmem:[#allocation2 + $0x58] sm:$0xff]
    %v116 = vld [vmem:[#allocation2 + $0x60] sm:$0xff]
    %v117 = vld [vmem:[#allocation2 + $0x68] sm:$0xff]
    %v118 = vld [vmem:[#allocation2 + $0x70] sm:$0xff]
    %v119 = vld [vmem:[#allocation2 + $0x78] sm:$0xff]
    %v120 = vld [vmem:[#allocation5] sm:$0xff]
    %v121 = vld [vmem:[#allocation5 + $0x8] sm:$0xff]
    %v122 = vld [vmem:[#allocation5 + $0x10] sm:$0xff]
    %v123 = vld [vmem:[#allocation5 + $0x18] sm:$0xff]
    %v124 = vld [vmem:[#allocation5 + $0x20] sm:$0xff]
    %v125 = vld [vmem:[#allocation5 + $0x28] sm:$0xff]
    %v126 = vld [vmem:[#allocation5 + $0x30] sm:$0xff]
    %v127 = vld [vmem:[#allocation5 + $0x38] sm:$0xff]
    %v128 = vld [vmem:[#allocation5 + $0x40] sm:$0xff]
    %v129 = vld [vmem:[#allocation5 + $0x48] sm:$0xff]
    %v130 = vld [vmem:[#allocation5 + $0x50] sm:$0xff]
    %v131 = vld [vmem:[#allocation5 + $0x58] sm:$0xff]
    %v132 = vld [vmem:[#allocation5 + $0x60] sm:$0xff]
    %v133 = vld [vmem:[#allocation5 + $0x68] sm:$0xff]
    %v134 = vld [vmem:[#allocation5 + $0x70] sm:$0xff]
    %v135 = vld [vmem:[#allocation5 + $0x78] sm:$0xff]
    %v136 = vld [vmem:[#allocation7] sm:$0xff]
    %v137 = vld [vmem:[#allocation7 + $0x8] sm:$0xff]
    %v138 = vld [vmem:[#allocation7 + $0x10] sm:$0xff]
    %v139 = vld [vmem:[#allocation7 + $0x18] sm:$0xff]
    %vm140 = vcmask 261120
    %v142 = vsel %vm140, %v104, 0
    %v145 = vsel %vm140, %v105, 0
    %v148 = vsel %vm140, %v106, 0
    %v151 = vsel %vm140, %v107, 0
    %v154 = vsel %vm140, %v108, 0
    %v157 = vsel %vm140, %v109, 0
    %v160 = vsel %vm140, %v110, 0
    %v163 = vsel %vm140, %v111, 0
    %v166 = vsel %vm140, %v112, 0
    %v169 = vsel %vm140, %v113, 0
    %v172 = vsel %vm140, %v114, 0
    %v175 = vsel %vm140, %v115, 0
    %v178 = vsel %vm140, %v116, 0
    %v181 = vsel %vm140, %v117, 0
    %v184 = vsel %vm140, %v118, 0
    %v187 = vsel %vm140, %v119, 0
    %189 = vmatprep.subr.mxu0 0.0
    %190 = vmatpush1.msra.mxu0 %v136
    %191 = vmatprep.subr.mxu0 0.0
    %192 = vmatpush1.msra.mxu0 %v137
    %193 = vmatprep.subr.mxu0 0.0
    %194 = vmatpush1.msra.mxu0 %v138
    %195 = vmatprep.subr.mxu0 0.0
    %196 = vmatpush1.msra.mxu0 %v139
    %197 = vmatprep.subr.mxu0 0.0
    %198 = vmatpush1.msra.mxu0 0.0
    %199 = vmatprep.subr.mxu0 0.0
    %200 = vmatpush1.msra.mxu0 0.0
    %201 = vmatprep.subr.mxu0 0.0
    %202 = vmatpush1.msra.mxu0 0.0
    %203 = vmatprep.subr.mxu0 0.0
    %204 = vmatpush1.msra.mxu0 0.0
    %205 = vmatprep.subr.mxu0 0.0
    %206 = vmatpush1.msra.mxu0 0.0
    %207 = vmatprep.subr.mxu0 0.0
    %208 = vmatpush1.msra.mxu0 0.0
    %209 = vmatprep.subr.mxu0 0.0
    %210 = vmatpush1.msra.mxu0 0.0
    %211 = vmatprep.subr.mxu0 0.0
    %212 = vmatpush1.msra.mxu0 0.0
    %213 = vmatprep.subr.mxu0 0.0
    %214 = vmatpush1.msra.mxu0 0.0
    %215 = vmatprep.subr.mxu0 0.0
    %216 = vmatpush1.msra.mxu0 0.0
    %217 = vmatprep.subr.mxu0 0.0
    %218 = vmatpush1.msra.mxu0 0.0
    %219 = vmatprep.subr.mxu0 0.0
    %220 = vmatpush1.msra.mxu0 0.0
    %221 = vmatprep.subr.mxu0 0.0
    %222 = vmatpush1.msra.mxu0 0.0
    %223 = vmatprep.subr.mxu0 0.0
    %224 = vmatpush1.msra.mxu0 0.0
    %225 = vmatprep.subr.mxu0 0.0
    %226 = vmatpush1.msra.mxu0 0.0
    %227 = vmatprep.subr.mxu0 0.0
    %228 = vmatpush1.msra.mxu0 0.0
    %229 = vmatprep.subr.mxu0 0.0
    %230 = vmatpush1.msra.mxu0 0.0
    %231 = vmatprep.subr.mxu0 0.0
    %232 = vmatpush1.msra.mxu0 0.0
    %233 = vmatprep.subr.mxu0 0.0
    %234 = vmatpush1.msra.mxu0 0.0
    %235 = vmatprep.subr.mxu0 0.0
    %236 = vmatpush1.msra.mxu0 0.0
    %237 = vmatprep.subr.mxu0 0.0
    %238 = vmatpush1.msra.mxu0 0.0
    %239 = vmatprep.subr.mxu0 0.0
    %240 = vmatpush1.msra.mxu0 0.0
    %241 = vmatprep.subr.mxu0 0.0
    %242 = vmatpush1.msra.mxu0 0.0
    %243 = vmatprep.subr.mxu0 0.0
    %244 = vmatpush1.msra.mxu0 0.0
    %245 = vmatprep.subr.mxu0 0.0
    %246 = vmatpush1.msra.mxu0 0.0
    %247 = vmatprep.subr.mxu0 0.0
    %248 = vmatpush1.msra.mxu0 0.0
    %249 = vmatprep.subr.mxu0 0.0
    %250 = vmatpush1.msra.mxu0 0.0
    %251 = vmatprep.subr.mxu0 0.0
    %252 = vmatpush1.msra.mxu0 0.0
    %253 = vmatprep.mubr.f32.mxu0 0.0
    %254 = vmatmul.mubr.f32.gmra.mrb[0].mxu0 %v142
    %v255 = vpop.f32.mrb[0].mxu0
    %v256 = vadd.f32 0.0, %v255
    %v257 = vpop.f32.mrb[0].mxu0
    %258 = vmatprep.mubr.f32.mxu0 0.0
    %259 = vmatmul.mubr.f32.gmra.mrb[0].mxu0 %v145
    %v260 = vpop.f32.mrb[0].mxu0
    %v261 = vadd.f32 0.0, %v260
    %v262 = vpop.f32.mrb[0].mxu0
    %263 = vmatprep.mubr.f32.mxu0 0.0
    %264 = vmatmul.mubr.f32.gmra.mrb[0].mxu0 %v148
    %v265 = vpop.f32.mrb[0].mxu0
    %v266 = vadd.f32 0.0, %v265
    %v267 = vpop.f32.mrb[0].mxu0
    %268 = vmatprep.mubr.f32.mxu0 0.0
    %269 = vmatmul.mubr.f32.gmra.mrb[0].mxu0 %v151
    %v270 = vpop.f32.mrb[0].mxu0
    %v271 = vadd.f32 0.0, %v270
    %v272 = vpop.f32.mrb[0].mxu0
    %273 = vmatprep.mubr.f32.mxu0 0.0
    %274 = vmatmul.mubr.f32.gmra.mrb[0].mxu0 %v154
    %v275 = vpop.f32.mrb[0].mxu0
    %v276 = vadd.f32 0.0, %v275
    %v277 = vpop.f32.mrb[0].mxu0
    %278 = vmatprep.mubr.f32.mxu0 0.0
    %279 = vmatmul.mubr.f32.gmra.mrb[0].mxu0 %v157
    %v280 = vpop.f32.mrb[0].mxu0
    %v281 = vadd.f32 0.0, %v280
    %v282 = vpop.f32.mrb[0].mxu0
    %283 = vmatprep.mubr.f32.mxu0 0.0
    %284 = vmatmul.mubr.f32.gmra.mrb[0].mxu0 %v160
    %v285 = vpop.f32.mrb[0].mxu0
    %v286 = vadd.f32 0.0, %v285
    %v287 = vpop.f32.mrb[0].mxu0
    %288 = vmatprep.mubr.f32.mxu0 0.0
    %289 = vmatmul.mubr.f32.gmra.mrb[0].mxu0 %v163
    %v290 = vpop.f32.mrb[0].mxu0
    %v291 = vadd.f32 0.0, %v290
    %v292 = vpop.f32.mrb[0].mxu0
    %293 = vmatprep.mubr.f32.mxu0 0.0
    %294 = vmatmul.mubr.f32.gmra.mrb[0].mxu0 %v166
    %v295 = vpop.f32.mrb[0].mxu0
    %v296 = vadd.f32 0.0, %v295
    %v297 = vpop.f32.mrb[0].mxu0
    %298 = vmatprep.mubr.f32.mxu0 0.0
    %299 = vmatmul.mubr.f32.gmra.mrb[0].mxu0 %v169
    %v300 = vpop.f32.mrb[0].mxu0
    %v301 = vadd.f32 0.0, %v300
    %v302 = vpop.f32.mrb[0].mxu0
    %303 = vmatprep.mubr.f32.mxu0 0.0
    %304 = vmatmul.mubr.f32.gmra.mrb[0].mxu0 %v172
    %v305 = vpop.f32.mrb[0].mxu0
    %v306 = vadd.f32 0.0, %v305
    %v307 = vpop.f32.mrb[0].mxu0
    %308 = vmatprep.mubr.f32.mxu0 0.0
    %309 = vmatmul.mubr.f32.gmra.mrb[0].mxu0 %v175
    %v310 = vpop.f32.mrb[0].mxu0
    %v311 = vadd.f32 0.0, %v310
    %v312 = vpop.f32.mrb[0].mxu0
    %313 = vmatprep.mubr.f32.mxu0 0.0
    %314 = vmatmul.mubr.f32.gmra.mrb[0].mxu0 %v178
    %v315 = vpop.f32.mrb[0].mxu0
    %v316 = vadd.f32 0.0, %v315
    %v317 = vpop.f32.mrb[0].mxu0
    %318 = vmatprep.mubr.f32.mxu0 0.0
    %319 = vmatmul.mubr.f32.gmra.mrb[0].mxu0 %v181
    %v320 = vpop.f32.mrb[0].mxu0
    %v321 = vadd.f32 0.0, %v320
    %v322 = vpop.f32.mrb[0].mxu0
    %323 = vmatprep.mubr.f32.mxu0 0.0
    %324 = vmatmul.mubr.f32.gmra.mrb[0].mxu0 %v184
    %v325 = vpop.f32.mrb[0].mxu0
    %v326 = vadd.f32 0.0, %v325
    %v327 = vpop.f32.mrb[0].mxu0
    %328 = vmatprep.mubr.f32.mxu0 0.0
    %329 = vmatmul.mubr.f32.gmra.mrb[0].mxu0 %v187
    %v330 = vpop.f32.mrb[0].mxu0
    %v331 = vadd.f32 0.0, %v330
    %v332 = vpop.f32.mrb[0].mxu0
    %333 = vdwg.mxu0
    %v334 = vld [vmem:[#allocation8] sm:$0xff]
    %v335 = vld [vmem:[#allocation8 + $0x8] sm:$0xff]
    %vm336 = vcmask 130048
    %v338 = vsel %vm336, %v120, 0
    %v341 = vsel %vm336, %v121, 0
    %v344 = vsel %vm336, %v122, 0
    %v347 = vsel %vm336, %v123, 0
    %v350 = vsel %vm336, %v124, 0
    %v353 = vsel %vm336, %v125, 0
    %v356 = vsel %vm336, %v126, 0
    %v359 = vsel %vm336, %v127, 0
    %v362 = vsel %vm336, %v128, 0
    %v365 = vsel %vm336, %v129, 0
    %v368 = vsel %vm336, %v130, 0
    %v371 = vsel %vm336, %v131, 0
    %v374 = vsel %vm336, %v132, 0
    %v377 = vsel %vm336, %v133, 0
    %v380 = vsel %vm336, %v134, 0
    %v383 = vsel %vm336, %v135, 0
    %385 = vmatprep.subr.mxu0 0.0
    %386 = vmatpush1.msra.mxu0 %v334
    %387 = vmatprep.subr.mxu0 0.0
    %388 = vmatpush1.msra.mxu0 %v335
    %389 = vmatprep.subr.mxu0 0.0
    %390 = vmatpush1.msra.mxu0 0.0
    %391 = vmatprep.subr.mxu0 0.0
    %392 = vmatpush1.msra.mxu0 0.0
    %393 = vmatprep.subr.mxu0 0.0
    %394 = vmatpush1.msra.mxu0 0.0
    %395 = vmatprep.subr.mxu0 0.0
    %396 = vmatpush1.msra.mxu0 0.0
    %397 = vmatprep.subr.mxu0 0.0
    %398 = vmatpush1.msra.mxu0 0.0
    %399 = vmatprep.subr.mxu0 0.0
    %400 = vmatpush1.msra.mxu0 0.0
    %401 = vmatprep.subr.mxu0 0.0
    %402 = vmatpush1.msra.mxu0 0.0
    %403 = vmatprep.subr.mxu0 0.0
    %404 = vmatpush1.msra.mxu0 0.0
    %405 = vmatprep.subr.mxu0 0.0
    %406 = vmatpush1.msra.mxu0 0.0
    %407 = vmatprep.subr.mxu0 0.0
    %408 = vmatpush1.msra.mxu0 0.0
    %409 = vmatprep.subr.mxu0 0.0
    %410 = vmatpush1.msra.mxu0 0.0
    %411 = vmatprep.subr.mxu0 0.0
    %412 = vmatpush1.msra.mxu0 0.0
    %413 = vmatprep.subr.mxu0 0.0
    %414 = vmatpush1.msra.mxu0 0.0
    %415 = vmatprep.subr.mxu0 0.0
    %416 = vmatpush1.msra.mxu0 0.0
    %417 = vmatprep.subr.mxu0 0.0
    %418 = vmatpush1.msra.mxu0 0.0
    %419 = vmatprep.subr.mxu0 0.0
    %420 = vmatpush1.msra.mxu0 0.0
    %421 = vmatprep.subr.mxu0 0.0
    %422 = vmatpush1.msra.mxu0 0.0
    %423 = vmatprep.subr.mxu0 0.0
    %424 = vmatpush1.msra.mxu0 0.0
    %425 = vmatprep.subr.mxu0 0.0
    %426 = vmatpush1.msra.mxu0 0.0
    %427 = vmatprep.subr.mxu0 0.0
    %428 = vmatpush1.msra.mxu0 0.0
    %429 = vmatprep.subr.mxu0 0.0
    %430 = vmatpush1.msra.mxu0 0.0
    %431 = vmatprep.subr.mxu0 0.0
    %432 = vmatpush1.msra.mxu0 0.0
    %433 = vmatprep.subr.mxu0 0.0
    %434 = vmatpush1.msra.mxu0 0.0
    %435 = vmatprep.subr.mxu0 0.0
    %436 = vmatpush1.msra.mxu0 0.0
    %437 = vmatprep.subr.mxu0 0.0
    %438 = vmatpush1.msra.mxu0 0.0
    %439 = vmatprep.subr.mxu0 0.0
    %440 = vmatpush1.msra.mxu0 0.0
    %441 = vmatprep.subr.mxu0 0.0
    %442 = vmatpush1.msra.mxu0 0.0
    %443 = vmatprep.subr.mxu0 0.0
    %444 = vmatpush1.msra.mxu0 0.0
    %445 = vmatprep.subr.mxu0 0.0
    %446 = vmatpush1.msra.mxu0 0.0
    %447 = vmatprep.subr.mxu0 0.0
    %448 = vmatpush1.msra.mxu0 0.0
    %449 = vmatprep.mubr.f32.mxu0 0.0
    %450 = vmatmul.mubr.f32.gmra.mrb[0].mxu0 %v338
    %v451 = vpop.f32.mrb[0].mxu0
    %v452 = vadd.f32 0.0, %v451
    %v453 = vpop.f32.mrb[0].mxu0
    %454 = vmatprep.mubr.f32.mxu0 0.0
    %455 = vmatmul.mubr.f32.gmra.mrb[0].mxu0 %v341
    %v456 = vpop.f32.mrb[0].mxu0
    %v457 = vadd.f32 0.0, %v456
    %v458 = vpop.f32.mrb[0].mxu0
    %459 = vmatprep.mubr.f32.mxu0 0.0
    %460 = vmatmul.mubr.f32.gmra.mrb[0].mxu0 %v344
    %v461 = vpop.f32.mrb[0].mxu0
    %v462 = vadd.f32 0.0, %v461
    %v463 = vpop.f32.mrb[0].mxu0
    %464 = vmatprep.mubr.f32.mxu0 0.0
    %465 = vmatmul.mubr.f32.gmra.mrb[0].mxu0 %v347
    %v466 = vpop.f32.mrb[0].mxu0
    %v467 = vadd.f32 0.0, %v466
    %v468 = vpop.f32.mrb[0].mxu0
    %469 = vmatprep.mubr.f32.mxu0 0.0
    %470 = vmatmul.mubr.f32.gmra.mrb[0].mxu0 %v350
    %v471 = vpop.f32.mrb[0].mxu0
    %v472 = vadd.f32 0.0, %v471
    %v473 = vpop.f32.mrb[0].mxu0
    %474 = vmatprep.mubr.f32.mxu0 0.0
    %475 = vmatmul.mubr.f32.gmra.mrb[0].mxu0 %v353
    %v476 = vpop.f32.mrb[0].mxu0
    %v477 = vadd.f32 0.0, %v476
    %v478 = vpop.f32.mrb[0].mxu0
    %479 = vmatprep.mubr.f32.mxu0 0.0
    %480 = vmatmul.mubr.f32.gmra.mrb[0].mxu0 %v356
    %v481 = vpop.f32.mrb[0].mxu0
    %v482 = vadd.f32 0.0, %v481
    %v483 = vpop.f32.mrb[0].mxu0
    %484 = vmatprep.mubr.f32.mxu0 0.0
    %485 = vmatmul.mubr.f32.gmra.mrb[0].mxu0 %v359
    %v486 = vpop.f32.mrb[0].mxu0
    %v487 = vadd.f32 0.0, %v486
    %v488 = vpop.f32.mrb[0].mxu0
    %489 = vmatprep.mubr.f32.mxu0 0.0
    %490 = vmatmul.mubr.f32.gmra.mrb[0].mxu0 %v362
    %v491 = vpop.f32.mrb[0].mxu0
    %v492 = vadd.f32 0.0, %v491
    %v493 = vpop.f32.mrb[0].mxu0
    %494 = vmatprep.mubr.f32.mxu0 0.0
    %495 = vmatmul.mubr.f32.gmra.mrb[0].mxu0 %v365
    %v496 = vpop.f32.mrb[0].mxu0
    %v497 = vadd.f32 0.0, %v496
    %v498 = vpop.f32.mrb[0].mxu0
    %499 = vmatprep.mubr.f32.mxu0 0.0
    %500 = vmatmul.mubr.f32.gmra.mrb[0].mxu0 %v368
    %v501 = vpop.f32.mrb[0].mxu0
    %v502 = vadd.f32 0.0, %v501
    %v503 = vpop.f32.mrb[0].mxu0
    %504 = vmatprep.mubr.f32.mxu0 0.0
    %505 = vmatmul.mubr.f32.gmra.mrb[0].mxu0 %v371
    %v506 = vpop.f32.mrb[0].mxu0
    %v507 = vadd.f32 0.0, %v506
    %v508 = vpop.f32.mrb[0].mxu0
    %509 = vmatprep.mubr.f32.mxu0 0.0
    %510 = vmatmul.mubr.f32.gmra.mrb[0].mxu0 %v374
    %v511 = vpop.f32.mrb[0].mxu0
    %v512 = vadd.f32 0.0, %v511
    %v513 = vpop.f32.mrb[0].mxu0
    %514 = vmatprep.mubr.f32.mxu0 0.0
    %515 = vmatmul.mubr.f32.gmra.mrb[0].mxu0 %v377
    %v516 = vpop.f32.mrb[0].mxu0
    %v517 = vadd.f32 0.0, %v516
    %v518 = vpop.f32.mrb[0].mxu0
    %519 = vmatprep.mubr.f32.mxu0 0.0
    %520 = vmatmul.mubr.f32.gmra.mrb[0].mxu0 %v380
    %v521 = vpop.f32.mrb[0].mxu0
    %v522 = vadd.f32 0.0, %v521
    %v523 = vpop.f32.mrb[0].mxu0
    %524 = vmatprep.mubr.f32.mxu0 0.0
    %525 = vmatmul.mubr.f32.gmra.mrb[0].mxu0 %v383
    %v526 = vpop.f32.mrb[0].mxu0
    %v527 = vadd.f32 0.0, %v526
    %v528 = vpop.f32.mrb[0].mxu0
    %529 = vdwg.mxu0
    %546 = vrot.lane.b32.xlu0 %v452, 64
    %v547 = vpop.permute.xlu0 %546
    %548 = vrot.lane.b32.xlu0 %v457, 64
    %v549 = vpop.permute.xlu0 %548
    %550 = vrot.lane.b32.xlu0 %v462, 64
    %v551 = vpop.permute.xlu0 %550
    %552 = vrot.lane.b32.xlu0 %v467, 64
    %v553 = vpop.permute.xlu0 %552
    %554 = vrot.lane.b32.xlu0 %v472, 64
    %v555 = vpop.permute.xlu0 %554
    %556 = vrot.lane.b32.xlu0 %v477, 64
    %v557 = vpop.permute.xlu0 %556
    %558 = vrot.lane.b32.xlu0 %v482, 64
    %v559 = vpop.permute.xlu0 %558
    %560 = vrot.lane.b32.xlu0 %v487, 64
    %v561 = vpop.permute.xlu0 %560
    %562 = vrot.lane.b32.xlu0 %v492, 64
    %v563 = vpop.permute.xlu0 %562
    %564 = vrot.lane.b32.xlu0 %v497, 64
    %v565 = vpop.permute.xlu0 %564
    %566 = vrot.lane.b32.xlu0 %v502, 64
    %v567 = vpop.permute.xlu0 %566
    %568 = vrot.lane.b32.xlu0 %v507, 64
    %v569 = vpop.permute.xlu0 %568
    %570 = vrot.lane.b32.xlu0 %v512, 64
    %v571 = vpop.permute.xlu0 %570
    %572 = vrot.lane.b32.xlu0 %v517, 64
    %v573 = vpop.permute.xlu0 %572
    %574 = vrot.lane.b32.xlu0 %v522, 64
    %v575 = vpop.permute.xlu0 %574
    %576 = vrot.lane.b32.xlu0 %v527, 64
    %v577 = vpop.permute.xlu0 %576
    %v594 = vadd.f32 %v256, %v547
    %v595 = vadd.f32 %v261, %v549
    %v596 = vadd.f32 %v266, %v551
    %v597 = vadd.f32 %v271, %v553
    %v598 = vadd.f32 %v276, %v555
    %v599 = vadd.f32 %v281, %v557
    %v600 = vadd.f32 %v286, %v559
    %v601 = vadd.f32 %v291, %v561
    %v602 = vadd.f32 %v296, %v563
    %v603 = vadd.f32 %v301, %v565
    %v604 = vadd.f32 %v306, %v567
    %v605 = vadd.f32 %v311, %v569
    %v606 = vadd.f32 %v316, %v571
    %v607 = vadd.f32 %v321, %v573
    %v608 = vadd.f32 %v326, %v575
    %v609 = vadd.f32 %v331, %v577
    %v610 = vld [vmem:[#allocation10] sm:$0x1]
    %v612 = vlaneseq
    %v613 = vshrl.u32 %v612, 7
    %v614 = vsub.s32 0, %v613
    %v615 = vrot.slane %v610, %v614
    %616 = vrot.lane.b32.xlu0 %v615, 64
    %v617 = vpop.permute.xlu0 %616
    %v619 = vadd.f32 %v594, %v617
    %v620 = vadd.f32 %v595, %v617
    %v621 = vadd.f32 %v596, %v617
    %v622 = vadd.f32 %v597, %v617
    %v623 = vadd.f32 %v598, %v617
    %v624 = vadd.f32 %v599, %v617
    %v625 = vadd.f32 %v600, %v617
    %v626 = vadd.f32 %v601, %v617
    %v627 = vadd.f32 %v602, %v617
    %v628 = vadd.f32 %v603, %v617
    %v629 = vadd.f32 %v604, %v617
    %v630 = vadd.f32 %v605, %v617
    %v631 = vadd.f32 %v606, %v617
    %v632 = vadd.f32 %v607, %v617
    %v633 = vadd.f32 %v608, %v617
    %v634 = vadd.f32 %v609, %v617
    %635 = vrot.lane.b32.xlu0 %v120, 16
    %v636 = vpop.permute.xlu0 %635
    %637 = vrot.lane.b32.xlu0 %v121, 16
    %v638 = vpop.permute.xlu0 %637
    %639 = vrot.lane.b32.xlu0 %v122, 16
    %v640 = vpop.permute.xlu0 %639
    %641 = vrot.lane.b32.xlu0 %v123, 16
    %v642 = vpop.permute.xlu0 %641
    %643 = vrot.lane.b32.xlu0 %v124, 16
    %v644 = vpop.permute.xlu0 %643
    %645 = vrot.lane.b32.xlu0 %v125, 16
    %v646 = vpop.permute.xlu0 %645
    %647 = vrot.lane.b32.xlu0 %v126, 16
    %v648 = vpop.permute.xlu0 %647
    %649 = vrot.lane.b32.xlu0 %v127, 16
    %v650 = vpop.permute.xlu0 %649
    %651 = vrot.lane.b32.xlu0 %v128, 16
    %v652 = vpop.permute.xlu0 %651
    %653 = vrot.lane.b32.xlu0 %v129, 16
    %v654 = vpop.permute.xlu0 %653
    %655 = vrot.lane.b32.xlu0 %v130, 16
    %v656 = vpop.permute.xlu0 %655
    %657 = vrot.lane.b32.xlu0 %v131, 16
    %v658 = vpop.permute.xlu0 %657
    %659 = vrot.lane.b32.xlu0 %v132, 16
    %v660 = vpop.permute.xlu0 %659
    %661 = vrot.lane.b32.xlu0 %v133, 16
    %v662 = vpop.permute.xlu0 %661
    %663 = vrot.lane.b32.xlu0 %v134, 16
    %v664 = vpop.permute.xlu0 %663
    %665 = vrot.lane.b32.xlu0 %v135, 16
    %v666 = vpop.permute.xlu0 %665
    %683 = vrot.lane.b32.xlu0 %v120, 32
    %v684 = vpop.permute.xlu0 %683
    %685 = vrot.lane.b32.xlu0 %v121, 32
    %v686 = vpop.permute.xlu0 %685
    %687 = vrot.lane.b32.xlu0 %v122, 32
    %v688 = vpop.permute.xlu0 %687
    %689 = vrot.lane.b32.xlu0 %v123, 32
    %v690 = vpop.permute.xlu0 %689
    %691 = vrot.lane.b32.xlu0 %v124, 32
    %v692 = vpop.permute.xlu0 %691
    %693 = vrot.lane.b32.xlu0 %v125, 32
    %v694 = vpop.permute.xlu0 %693
    %695 = vrot.lane.b32.xlu0 %v126, 32
    %v696 = vpop.permute.xlu0 %695
    %697 = vrot.lane.b32.xlu0 %v127, 32
    %v698 = vpop.permute.xlu0 %697
    %699 = vrot.lane.b32.xlu0 %v128, 32
    %v700 = vpop.permute.xlu0 %699
    %701 = vrot.lane.b32.xlu0 %v129, 32
    %v702 = vpop.permute.xlu0 %701
    %703 = vrot.lane.b32.xlu0 %v130, 32
    %v704 = vpop.permute.xlu0 %703
    %705 = vrot.lane.b32.xlu0 %v131, 32
    %v706 = vpop.permute.xlu0 %705
    %707 = vrot.lane.b32.xlu0 %v132, 32
    %v708 = vpop.permute.xlu0 %707
    %709 = vrot.lane.b32.xlu0 %v133, 32
    %v710 = vpop.permute.xlu0 %709
    %711 = vrot.lane.b32.xlu0 %v134, 32
    %v712 = vpop.permute.xlu0 %711
    %713 = vrot.lane.b32.xlu0 %v135, 32
    %v714 = vpop.permute.xlu0 %713
    %731 = vrot.lane.b32.xlu0 %v120, 48
    %v732 = vpop.permute.xlu0 %731
    %733 = vrot.lane.b32.xlu0 %v121, 48
    %v734 = vpop.permute.xlu0 %733
    %735 = vrot.lane.b32.xlu0 %v122, 48
    %v736 = vpop.permute.xlu0 %735
    %737 = vrot.lane.b32.xlu0 %v123, 48
    %v738 = vpop.permute.xlu0 %737
    %739 = vrot.lane.b32.xlu0 %v124, 48
    %v740 = vpop.permute.xlu0 %739
    %741 = vrot.lane.b32.xlu0 %v125, 48
    %v742 = vpop.permute.xlu0 %741
    %743 = vrot.lane.b32.xlu0 %v126, 48
    %v744 = vpop.permute.xlu0 %743
    %745 = vrot.lane.b32.xlu0 %v127, 48
    %v746 = vpop.permute.xlu0 %745
    %747 = vrot.lane.b32.xlu0 %v128, 48
    %v748 = vpop.permute.xlu0 %747
    %749 = vrot.lane.b32.xlu0 %v129, 48
    %v750 = vpop.permute.xlu0 %749
    %751 = vrot.lane.b32.xlu0 %v130, 48
    %v752 = vpop.permute.xlu0 %751
    %753 = vrot.lane.b32.xlu0 %v131, 48
    %v754 = vpop.permute.xlu0 %753
    %755 = vrot.lane.b32.xlu0 %v132, 48
    %v756 = vpop.permute.xlu0 %755
    %757 = vrot.lane.b32.xlu0 %v133, 48
    %v758 = vpop.permute.xlu0 %757
    %759 = vrot.lane.b32.xlu0 %v134, 48
    %v760 = vpop.permute.xlu0 %759
    %761 = vrot.lane.b32.xlu0 %v135, 48
    %v762 = vpop.permute.xlu0 %761
    %v779 = vsel %vm336, %v120, %v636
    %v780 = vsel %vm336, %v121, %v638
    %v781 = vsel %vm336, %v122, %v640
    %v782 = vsel %vm336, %v123, %v642
    %v783 = vsel %vm336, %v124, %v644
    %v784 = vsel %vm336, %v125, %v646
    %v785 = vsel %vm336, %v126, %v648
    %v786 = vsel %vm336, %v127, %v650
    %v787 = vsel %vm336, %v128, %v652
    %v788 = vsel %vm336, %v129, %v654
    %v789 = vsel %vm336, %v130, %v656
    %v790 = vsel %vm336, %v131, %v658
    %v791 = vsel %vm336, %v132, %v660
    %v792 = vsel %vm336, %v133, %v662
    %v793 = vsel %vm336, %v134, %v664
    %v794 = vsel %vm336, %v135, %v666
    %v795 = vsel %vm140, %v779, %v684
    %v796 = vsel %vm140, %v780, %v686
    %v797 = vsel %vm140, %v781, %v688
    %v798 = vsel %vm140, %v782, %v690
    %v799 = vsel %vm140, %v783, %v692
    %v800 = vsel %vm140, %v784, %v694
    %v801 = vsel %vm140, %v785, %v696
    %v802 = vsel %vm140, %v786, %v698
    %v803 = vsel %vm140, %v787, %v700
    %v804 = vsel %vm140, %v788, %v702
    %v805 = vsel %vm140, %v789, %v704
    %v806 = vsel %vm140, %v790, %v706
    %v807 = vsel %vm140, %v791, %v708
    %v808 = vsel %vm140, %v792, %v710
    %v809 = vsel %vm140, %v793, %v712
    %v810 = vsel %vm140, %v794, %v714
    %vm811 = vcmask 392192
    %v812 = vsel %vm811, %v795, %v732
    %v813 = vsel %vm811, %v796, %v734
    %v814 = vsel %vm811, %v797, %v736
    %v815 = vsel %vm811, %v798, %v738
    %v816 = vsel %vm811, %v799, %v740
    %v817 = vsel %vm811, %v800, %v742
    %v818 = vsel %vm811, %v801, %v744
    %v819 = vsel %vm811, %v802, %v746
    %v820 = vsel %vm811, %v803, %v748
    %v821 = vsel %vm811, %v804, %v750
    %v822 = vsel %vm811, %v805, %v752
    %v823 = vsel %vm811, %v806, %v754
    %v824 = vsel %vm811, %v807, %v756
    %v825 = vsel %vm811, %v808, %v758
    %v826 = vsel %vm811, %v809, %v760
    %v827 = vsel %vm811, %v810, %v762
    %v828 = vmul.f32 %v256, %v812
    %v829 = vmul.f32 %v261, %v813
    %v830 = vmul.f32 %v266, %v814
    %v831 = vmul.f32 %v271, %v815
    %v832 = vmul.f32 %v276, %v816
    %v833 = vmul.f32 %v281, %v817
    %v834 = vmul.f32 %v286, %v818
    %v835 = vmul.f32 %v291, %v819
    %v836 = vmul.f32 %v296, %v820
    %v837 = vmul.f32 %v301, %v821
    %v838 = vmul.f32 %v306, %v822
    %v839 = vmul.f32 %v311, %v823
    %v840 = vmul.f32 %v316, %v824
    %v841 = vmul.f32 %v321, %v825
    %v842 = vmul.f32 %v326, %v826
    %v843 = vmul.f32 %v331, %v827
    %v844 = vld [vmem:[#allocation11] sm:$0xff]
    %v845 = vld [vmem:[#allocation11 + $0x8] sm:$0xff]
    %v846 = vld [vmem:[#allocation11 + $0x10] sm:$0xff]
    %v847 = vld [vmem:[#allocation11 + $0x18] sm:$0xff]
    %v848 = vld [vmem:[#allocation11 + $0x20] sm:$0xff]
    %v849 = vld [vmem:[#allocation11 + $0x28] sm:$0xff]
    %v850 = vld [vmem:[#allocation11 + $0x30] sm:$0xff]
    %v851 = vld [vmem:[#allocation11 + $0x38] sm:$0xff]
    %vm852 = vcmask 523264
    %v854 = vsel %vm852, %v828, 0
    %v857 = vsel %vm852, %v829, 0
    %v860 = vsel %vm852, %v830, 0
    %v863 = vsel %vm852, %v831, 0
    %v866 = vsel %vm852, %v832, 0
    %v869 = vsel %vm852, %v833, 0
    %v872 = vsel %vm852, %v834, 0
    %v875 = vsel %vm852, %v835, 0
    %v878 = vsel %vm852, %v836, 0
    %v881 = vsel %vm852, %v837, 0
    %v884 = vsel %vm852, %v838, 0
    %v887 = vsel %vm852, %v839, 0
    %v890 = vsel %vm852, %v840, 0
    %v893 = vsel %vm852, %v841, 0
    %v896 = vsel %vm852, %v842, 0
    %v899 = vsel %vm852, %v843, 0
    %901 = vmatprep.subr.mxu0 0.0
    %902 = vmatpush1.msra.mxu0 %v844
    %903 = vmatprep.subr.mxu0 0.0
    %904 = vmatpush1.msra.mxu0 %v845
    %905 = vmatprep.subr.mxu0 0.0
    %906 = vmatpush1.msra.mxu0 %v846
    %907 = vmatprep.subr.mxu0 0.0
    %908 = vmatpush1.msra.mxu0 %v847
    %909 = vmatprep.subr.mxu0 0.0
    %910 = vmatpush1.msra.mxu0 %v848
    %911 = vmatprep.subr.mxu0 0.0
    %912 = vmatpush1.msra.mxu0 %v849
    %913 = vmatprep.subr.mxu0 0.0
    %914 = vmatpush1.msra.mxu0 %v850
    %915 = vmatprep.subr.mxu0 0.0
    %916 = vmatpush1.msra.mxu0 %v851
    %917 = vmatprep.subr.mxu0 0.0
    %918 = vmatpush1.msra.mxu0 0.0
    %919 = vmatprep.subr.mxu0 0.0
    %920 = vmatpush1.msra.mxu0 0.0
    %921 = vmatprep.subr.mxu0 0.0
    %922 = vmatpush1.msra.mxu0 0.0
    %923 = vmatprep.subr.mxu0 0.0
    %924 = vmatpush1.msra.mxu0 0.0
    %925 = vmatprep.subr.mxu0 0.0
    %926 = vmatpush1.msra.mxu0 0.0
    %927 = vmatprep.subr.mxu0 0.0
    %928 = vmatpush1.msra.mxu0 0.0
    %929 = vmatprep.subr.mxu0 0.0
    %930 = vmatpush1.msra.mxu0 0.0
    %931 = vmatprep.subr.mxu0 0.0
    %932 = vmatpush1.msra.mxu0 0.0
    %933 = vmatprep.subr.mxu0 0.0
    %934 = vmatpush1.msra.mxu0 0.0
    %935 = vmatprep.subr.mxu0 0.0
    %936 = vmatpush1.msra.mxu0 0.0
    %937 = vmatprep.subr.mxu0 0.0
    %938 = vmatpush1.msra.mxu0 0.0
    %939 = vmatprep.subr.mxu0 0.0
    %940 = vmatpush1.msra.mxu0 0.0
    %941 = vmatprep.subr.mxu0 0.0
    %942 = vmatpush1.msra.mxu0 0.0
    %943 = vmatprep.subr.mxu0 0.0
    %944 = vmatpush1.msra.mxu0 0.0
    %945 = vmatprep.subr.mxu0 0.0
    %946 = vmatpush1.msra.mxu0 0.0
    %947 = vmatprep.subr.mxu0 0.0
    %948 = vmatpush1.msra.mxu0 0.0
    %949 = vmatprep.subr.mxu0 0.0
    %950 = vmatpush1.msra.mxu0 0.0
    %951 = vmatprep.subr.mxu0 0.0
    %952 = vmatpush1.msra.mxu0 0.0
    %953 = vmatprep.subr.mxu0 0.0
    %954 = vmatpush1.msra.mxu0 0.0
    %955 = vmatprep.subr.mxu0 0.0
    %956 = vmatpush1.msra.mxu0 0.0
    %957 = vmatprep.subr.mxu0 0.0
    %958 = vmatpush1.msra.mxu0 0.0
    %959 = vmatprep.subr.mxu0 0.0
    %960 = vmatpush1.msra.mxu0 0.0
    %961 = vmatprep.subr.mxu0 0.0
    %962 = vmatpush1.msra.mxu0 0.0
    %963 = vmatprep.subr.mxu0 0.0
    %964 = vmatpush1.msra.mxu0 0.0
    %965 = vmatprep.mubr.f32.mxu0 0.0
    %966 = vmatmul.mubr.f32.gmra.mrb[0].mxu0 %v854
    %v967 = vpop.f32.mrb[0].mxu0
    %v968 = vadd.f32 0.0, %v967
    %v969 = vpop.f32.mrb[0].mxu0
    %970 = vmatprep.mubr.f32.mxu0 0.0
    %971 = vmatmul.mubr.f32.gmra.mrb[0].mxu0 %v857
    %v972 = vpop.f32.mrb[0].mxu0
    %v973 = vadd.f32 0.0, %v972
    %v974 = vpop.f32.mrb[0].mxu0
    %975 = vmatprep.mubr.f32.mxu0 0.0
    %976 = vmatmul.mubr.f32.gmra.mrb[0].mxu0 %v860
    %v977 = vpop.f32.mrb[0].mxu0
    %v978 = vadd.f32 0.0, %v977
    %v979 = vpop.f32.mrb[0].mxu0
    %980 = vmatprep.mubr.f32.mxu0 0.0
    %981 = vmatmul.mubr.f32.gmra.mrb[0].mxu0 %v863
    %v982 = vpop.f32.mrb[0].mxu0
    %v983 = vadd.f32 0.0, %v982
    %v984 = vpop.f32.mrb[0].mxu0
    %985 = vmatprep.mubr.f32.mxu0 0.0
    %986 = vmatmul.mubr.f32.gmra.mrb[0].mxu0 %v866
    %v987 = vpop.f32.mrb[0].mxu0
    %v988 = vadd.f32 0.0, %v987
    %v989 = vpop.f32.mrb[0].mxu0
    %990 = vmatprep.mubr.f32.mxu0 0.0
    %991 = vmatmul.mubr.f32.gmra.mrb[0].mxu0 %v869
    %v992 = vpop.f32.mrb[0].mxu0
    %v993 = vadd.f32 0.0, %v992
    %v994 = vpop.f32.mrb[0].mxu0
    %995 = vmatprep.mubr.f32.mxu0 0.0
    %996 = vmatmul.mubr.f32.gmra.mrb[0].mxu0 %v872
    %v997 = vpop.f32.mrb[0].mxu0
    %v998 = vadd.f32 0.0, %v997
    %v999 = vpop.f32.mrb[0].mxu0
    %1000 = vmatprep.mubr.f32.mxu0 0.0
    %1001 = vmatmul.mubr.f32.gmra.mrb[0].mxu0 %v875
    %v1002 = vpop.f32.mrb[0].mxu0
    %v1003 = vadd.f32 0.0, %v1002
    %v1004 = vpop.f32.mrb[0].mxu0
    %1005 = vmatprep.mubr.f32.mxu0 0.0
    %1006 = vmatmul.mubr.f32.gmra.mrb[0].mxu0 %v878
    %v1007 = vpop.f32.mrb[0].mxu0
    %v1008 = vadd.f32 0.0, %v1007
    %v1009 = vpop.f32.mrb[0].mxu0
    %1010 = vmatprep.mubr.f32.mxu0 0.0
    %1011 = vmatmul.mubr.f32.gmra.mrb[0].mxu0 %v881
    %v1012 = vpop.f32.mrb[0].mxu0
    %v1013 = vadd.f32 0.0, %v1012
    %v1014 = vpop.f32.mrb[0].mxu0
    %1015 = vmatprep.mubr.f32.mxu0 0.0
    %1016 = vmatmul.mubr.f32.gmra.mrb[0].mxu0 %v884
    %v1017 = vpop.f32.mrb[0].mxu0
    %v1018 = vadd.f32 0.0, %v1017
    %v1019 = vpop.f32.mrb[0].mxu0
    %1020 = vmatprep.mubr.f32.mxu0 0.0
    %1021 = vmatmul.mubr.f32.gmra.mrb[0].mxu0 %v887
    %v1022 = vpop.f32.mrb[0].mxu0
    %v1023 = vadd.f32 0.0, %v1022
    %v1024 = vpop.f32.mrb[0].mxu0
    %1025 = vmatprep.mubr.f32.mxu0 0.0
    %1026 = vmatmul.mubr.f32.gmra.mrb[0].mxu0 %v890
    %v1027 = vpop.f32.mrb[0].mxu0
    %v1028 = vadd.f32 0.0, %v1027
    %v1029 = vpop.f32.mrb[0].mxu0
    %1030 = vmatprep.mubr.f32.mxu0 0.0
    %1031 = vmatmul.mubr.f32.gmra.mrb[0].mxu0 %v893
    %v1032 = vpop.f32.mrb[0].mxu0
    %v1033 = vadd.f32 0.0, %v1032
    %v1034 = vpop.f32.mrb[0].mxu0
    %1035 = vmatprep.mubr.f32.mxu0 0.0
    %1036 = vmatmul.mubr.f32.gmra.mrb[0].mxu0 %v896
    %v1037 = vpop.f32.mrb[0].mxu0
    %v1038 = vadd.f32 0.0, %v1037
    %v1039 = vpop.f32.mrb[0].mxu0
    %1040 = vmatprep.mubr.f32.mxu0 0.0
    %1041 = vmatmul.mubr.f32.gmra.mrb[0].mxu0 %v899
    %v1042 = vpop.f32.mrb[0].mxu0
    %v1043 = vadd.f32 0.0, %v1042
    %v1044 = vpop.f32.mrb[0].mxu0
    %1045 = vdwg.mxu0
    %1062 = vrot.lane.b32.xlu0 %v968, 64
    %v1063 = vpop.permute.xlu0 %1062
    %1064 = vrot.lane.b32.xlu0 %v973, 64
    %v1065 = vpop.permute.xlu0 %1064
    %1066 = vrot.lane.b32.xlu0 %v978, 64
    %v1067 = vpop.permute.xlu0 %1066
    %1068 = vrot.lane.b32.xlu0 %v983, 64
    %v1069 = vpop.permute.xlu0 %1068
    %1070 = vrot.lane.b32.xlu0 %v988, 64
    %v1071 = vpop.permute.xlu0 %1070
    %1072 = vrot.lane.b32.xlu0 %v993, 64
    %v1073 = vpop.permute.xlu0 %1072
    %1074 = vrot.lane.b32.xlu0 %v998, 64
    %v1075 = vpop.permute.xlu0 %1074
    %1076 = vrot.lane.b32.xlu0 %v1003, 64
    %v1077 = vpop.permute.xlu0 %1076
    %1078 = vrot.lane.b32.xlu0 %v1008, 64
    %v1079 = vpop.permute.xlu0 %1078
    %1080 = vrot.lane.b32.xlu0 %v1013, 64
    %v1081 = vpop.permute.xlu0 %1080
    %1082 = vrot.lane.b32.xlu0 %v1018, 64
    %v1083 = vpop.permute.xlu0 %1082
    %1084 = vrot.lane.b32.xlu0 %v1023, 64
    %v1085 = vpop.permute.xlu0 %1084
    %1086 = vrot.lane.b32.xlu0 %v1028, 64
    %v1087 = vpop.permute.xlu0 %1086
    %1088 = vrot.lane.b32.xlu0 %v1033, 64
    %v1089 = vpop.permute.xlu0 %1088
    %1090 = vrot.lane.b32.xlu0 %v1038, 64
    %v1091 = vpop.permute.xlu0 %1090
    %1092 = vrot.lane.b32.xlu0 %v1043, 64
    %v1093 = vpop.permute.xlu0 %1092
    %v1110 = vadd.f32 %v619, %v1063
    %v1111 = vadd.f32 %v620, %v1065
    %v1112 = vadd.f32 %v621, %v1067
    %v1113 = vadd.f32 %v622, %v1069
    %v1114 = vadd.f32 %v623, %v1071
    %v1115 = vadd.f32 %v624, %v1073
    %v1116 = vadd.f32 %v625, %v1075
    %v1117 = vadd.f32 %v626, %v1077
    %v1118 = vadd.f32 %v627, %v1079
    %v1119 = vadd.f32 %v628, %v1081
    %v1120 = vadd.f32 %v629, %v1083
    %v1121 = vadd.f32 %v630, %v1085
    %v1122 = vadd.f32 %v631, %v1087
    %v1123 = vadd.f32 %v632, %v1089
    %v1124 = vadd.f32 %v633, %v1091
    %v1125 = vadd.f32 %v634, %v1093
    %1142 = vrot.lane.b32.xlu0 %v1110, 64
    %v1143 = vpop.permute.xlu0 %1142
    %1144 = vrot.lane.b32.xlu0 %v1111, 64
    %v1145 = vpop.permute.xlu0 %1144
    %1146 = vrot.lane.b32.xlu0 %v1112, 64
    %v1147 = vpop.permute.xlu0 %1146
    %1148 = vrot.lane.b32.xlu0 %v1113, 64
    %v1149 = vpop.permute.xlu0 %1148
    %1150 = vrot.lane.b32.xlu0 %v1114, 64
    %v1151 = vpop.permute.xlu0 %1150
    %1152 = vrot.lane.b32.xlu0 %v1115, 64
    %v1153 = vpop.permute.xlu0 %1152
    %1154 = vrot.lane.b32.xlu0 %v1116, 64
    %v1155 = vpop.permute.xlu0 %1154
    %1156 = vrot.lane.b32.xlu0 %v1117, 64
    %v1157 = vpop.permute.xlu0 %1156
    %1158 = vrot.lane.b32.xlu0 %v1118, 64
    %v1159 = vpop.permute.xlu0 %1158
    %1160 = vrot.lane.b32.xlu0 %v1119, 64
    %v1161 = vpop.permute.xlu0 %1160
    %1162 = vrot.lane.b32.xlu0 %v1120, 64
    %v1163 = vpop.permute.xlu0 %1162
    %1164 = vrot.lane.b32.xlu0 %v1121, 64
    %v1165 = vpop.permute.xlu0 %1164
    %1166 = vrot.lane.b32.xlu0 %v1122, 64
    %v1167 = vpop.permute.xlu0 %1166
    %1168 = vrot.lane.b32.xlu0 %v1123, 64
    %v1169 = vpop.permute.xlu0 %1168
    %1170 = vrot.lane.b32.xlu0 %v1124, 64
    %v1171 = vpop.permute.xlu0 %1170
    %1172 = vrot.lane.b32.xlu0 %v1125, 64
    %v1173 = vpop.permute.xlu0 %1172
    %vm1190 = vcmask 31744
    %v1191 = vsel %vm1190, %v1143, 0.0
    %v1192 = vsel %vm1190, %v1145, 0.0
    %v1193 = vsel %vm1190, %v1147, 0.0
    %v1194 = vsel %vm1190, %v1149, 0.0
    %v1195 = vsel %vm1190, %v1151, 0.0
    %v1196 = vsel %vm1190, %v1153, 0.0
    %v1197 = vsel %vm1190, %v1155, 0.0
    %v1198 = vsel %vm1190, %v1157, 0.0
    %v1199 = vsel %vm1190, %v1159, 0.0
    %v1200 = vsel %vm1190, %v1161, 0.0
    %v1201 = vsel %vm1190, %v1163, 0.0
    %v1202 = vsel %vm1190, %v1165, 0.0
    %v1203 = vsel %vm1190, %v1167, 0.0
    %v1204 = vsel %vm1190, %v1169, 0.0
    %v1205 = vsel %vm1190, %v1171, 0.0
    %v1206 = vsel %vm1190, %v1173, 0.0
    %1207 = vxpose.xlu0.b32.start [1/16] %v1191, 128
    %1208 = vxpose.xlu0.b32.cont [2/16] %v1192, 128
    %1209 = vxpose.xlu0.b32.cont [3/16] %v1193, 128
    %1210 = vxpose.xlu0.b32.cont [4/16] %v1194, 128
    %1211 = vxpose.xlu0.b32.cont [5/16] %v1195, 128
    %1212 = vxpose.xlu0.b32.cont [6/16] %v1196, 128
    %1213 = vxpose.xlu0.b32.cont [7/16] %v1197, 128
    %1214 = vxpose.xlu0.b32.cont [8/16] %v1198, 128
    %1215 = vxpose.xlu0.b32.cont [9/16] %v1199, 128
    %1216 = vxpose.xlu0.b32.cont [10/16] %v1200, 128
    %1217 = vxpose.xlu0.b32.cont [11/16] %v1201, 128
    %1218 = vxpose.xlu0.b32.cont [12/16] %v1202, 128
    %1219 = vxpose.xlu0.b32.cont [13/16] %v1203, 128
    %1220 = vxpose.xlu0.b32.cont [14/16] %v1204, 128
    %1221 = vxpose.xlu0.b32.cont [15/16] %v1205, 128
    %1222 = vxpose.xlu0.b32.end [16/16] %v1206, 128
    %v1223 = vpop.trf.xlu0
    %v1224 = vpop.trf.xlu0
    %v1225 = vpop.trf.xlu0
    %v1226 = vpop.trf.xlu0
    %v1227 = vpop.trf.xlu0
    %v1228 = vpop.trf.xlu0
    %v1229 = vpop.trf.xlu0
    %v1230 = vpop.trf.xlu0
    %v1231 = vpop.trf.xlu0
    %v1232 = vpop.trf.xlu0
    %v1233 = vpop.trf.xlu0
    %v1234 = vpop.trf.xlu0
    %v1235 = vpop.trf.xlu0
    %v1236 = vpop.trf.xlu0
    %v1237 = vpop.trf.xlu0
    %v1238 = vpop.trf.xlu0
    %1239 = vst [vmem:[#allocation13] sm:$0xf] %v1223
    // Predicated region
    $region50: #{tpu_custom_call.1} parent=1 // pred_check
      _
    $region51: #{tpu_custom_call.1} parent=1 // pred_check_branch
      %1241 = sbr.rel (0) target = $region53
    $region52: #{tpu_custom_call.1} parent=1 // pred_region
      %s1243 = ssub.s32 64, 64
      %1244 = vsyncadd [#allocation4], %s1243
      %s1246 = sshll.u32 [#allocation13], 4
      %s1247 = int_to_ptr.vmem [resolvable:$true] %s1246
      %1249 = dma.vmem_to_hbm [thread:$0]  %s1247, 64, %s6, [#allocation4]
    $region53: #{tpu_custom_call.1} parent=1 // pred_fallthru
      _
    // Predicated region
    $region54: #{tpu_custom_call.1} parent=1 // pred_check
      _
    $region55: #{tpu_custom_call.1} parent=1 // pred_check_branch
      %1251 = sbr.rel (0) target = $region57
    $region56: #{tpu_custom_call.1} parent=1 // pred_region
      %1252 = dma.done [#allocation4], 64
    $region57: #{tpu_custom_call.1} parent=1 // pred_fallthru
      _
    %1253 = vsyncpa [#allocation3], 1
    %1254 = vsyncpa [#allocation6], 1
    %1255 = vsyncpa [#allocation9], 1
    %1256 = vsyncpa [#allocation12], 1
    %1257 = vsyncpa [#allocation4], 1

</llo_original>
